<compile_context>
chip_gen: v6e
topology: v6e:2x2x1
jax: 0.10.0
libtpu: 0.0.40
codegen_flags: <defaults>
</compile_context>

<pallas_src>
import functools

import jax
import jax.numpy as jnp
from jax.experimental import pallas as pl
from jax.experimental.pallas import tpu as pltpu


def gru_lm_kernel(ids_ref, emb_ref, wih_ref, whh_ref, bih_ref, bhh_ref,
                  wfc_ref, bfc_ref, y_ref, gx_scr, h_scr, *,
                  seq_len, batch, hidden_size, vocab_size, apply_softmax):
    """Whole GRU-LM forward pass in one kernel invocation.

    Refs (all whole-array VMEM blocks):
      ids_ref : (T*B, 1) int32   token ids, time-major rows (row = t*B + b)
      emb_ref : (V, E)           embedding table (padding_idx row is zero)
      wih_ref : (E, 3H)          input->gates weights (PyTorch weight_ih_l0, transposed)
      whh_ref : (H, 3H)          hidden->gates weights (PyTorch weight_hh_l0, transposed)
      bih_ref : (1, 3H)          bias_ih_l0
      bhh_ref : (1, 3H)          bias_hh_l0
      wfc_ref : (H, Vp)          fc weight, vocab zero-padded to Vp (multiple of 128)
      bfc_ref : (1, Vp)          fc bias, vocab zero-padded
      y_ref   : (T*B, Vp)        logits (or softmax probs), time-major rows
      gx_scr  : (T*B, 3H) VMEM   hoisted input-projection results, all timesteps
      h_scr   : (T*B, H)  VMEM   per-timestep hidden states (input to the fc matmul)
    """
    T, B, H, V = seq_len, batch, hidden_size, vocab_size
    N = T * B

    # --- Embedding lookup as a one-hot matmul (MXU, no gather) ---------------
    ids = ids_ref[...]                                               # (N, 1) int32
    vocab_iota = jax.lax.broadcasted_iota(jnp.int32, (N, emb_ref.shape[0]), 1)
    one_hot = (ids == vocab_iota).astype(jnp.float32)                # (N, V)
    x_emb = jnp.dot(one_hot, emb_ref[...],
                    preferred_element_type=jnp.float32)              # (N, E)

    # --- Hoisted input projection for ALL timesteps (one big matmul) ---------
    gx_scr[...] = (jnp.dot(x_emb, wih_ref[...],
                           preferred_element_type=jnp.float32) + bih_ref[...])

    # --- Recurrence: only h @ W_hh remains in the serial dependency chain ----
    w_hh = whh_ref[...]                          # hoist loads out of the loop
    b_hh = bhh_ref[...]
    h = jnp.zeros((B, H), jnp.float32)           # hidden state stays in vregs
    for t in range(T):                           # fully unrolled (T static & small)
        gx_t = gx_scr[t * B:(t + 1) * B, :]      # (B, 3H), static slice
        gh = jnp.dot(h, w_hh, preferred_element_type=jnp.float32) + b_hh
        # PyTorch GRU gate ordering: [r, z, n]
        r = jax.nn.sigmoid(gx_t[:, 0:H] + gh[:, 0:H])
        z = jax.nn.sigmoid(gx_t[:, H:2 * H] + gh[:, H:2 * H])
        n = jnp.tanh(gx_t[:, 2 * H:3 * H] + r * gh[:, 2 * H:3 * H])
        h = (1.0 - z) * n + z * h
        h_scr[t * B:(t + 1) * B, :] = h

    # --- Hoisted output projection across all timesteps ----------------------
    # TODO(synk): the reference calls F.dropout with its default training=True
    # (stochastic zeroing even at inference); treated as identity to keep the
    # kernel deterministic.
    logits = (jnp.dot(h_scr[...], wfc_ref[...],
                      preferred_element_type=jnp.float32) + bfc_ref[...])   # (N, Vp)
    if apply_softmax:
        v_pad = y_ref.shape[-1]
        col = jax.lax.broadcasted_iota(jnp.int32, (N, v_pad), 1)
        logits = jnp.where(col < V, logits, jnp.float32(-1e30))  # mask vocab padding
        logits = jax.nn.softmax(logits, axis=-1)
    y_ref[...] = logits.astype(y_ref.dtype)


@functools.partial(jax.jit, static_argnames=("apply_softmax",))
def gru_annotations_lm_forward(x_in, params, apply_softmax=False):
    """x_in: (B, T) int32 token ids -> (B, T, V) float32 logits (or probs)."""
    emb = params["char_emb"]      # (V, E), row padding_idx is all zeros
    w_ih = params["w_ih"]         # (E, 3H)
    w_hh = params["w_hh"]         # (H, 3H)
    b_ih = params["b_ih"]         # (3H,)
    b_hh = params["b_hh"]         # (3H,)
    w_fc = params["w_fc"]         # (H, V)
    b_fc = params["b_fc"]         # (V,)

    B, T = x_in.shape
    V, E = emb.shape
    H = w_hh.shape[0]
    N = T * B
    Vp = 128 * pl.cdiv(V, 128)    # lane-dense (multiple-of-128) logits width

    # Time-major flattened token ids (row = t*B + b); tiny int op.
    ids = jnp.transpose(x_in).reshape(N, 1).astype(jnp.int32)

    b_ih2 = b_ih.reshape(1, 3 * H)
    b_hh2 = b_hh.reshape(1, 3 * H)
    # Zero-pad the fc weight / bias to the lane-dense vocab width.
    w_fc_p = jnp.zeros((H, Vp), jnp.float32).at[:, :V].set(w_fc)
    b_fc_p = jnp.zeros((1, Vp), jnp.float32).at[:, :V].set(b_fc.reshape(1, V))

    kernel = functools.partial(gru_lm_kernel, seq_len=T, batch=B, hidden_size=H,
                               vocab_size=V, apply_softmax=apply_softmax)

    y2d = pl.pallas_call(
        kernel,
        out_shape=jax.ShapeDtypeStruct((N, Vp), jnp.float32),
        scratch_shapes=[pltpu.VMEM((N, 3 * H), jnp.float32),   # gx for all steps
                        pltpu.VMEM((N, H), jnp.float32)],      # h  for all steps
    )(ids, emb, w_ih, w_hh, b_ih2, b_hh2, w_fc_p, b_fc_p)

    # (T*B, Vp) time-major -> (B, T, V) batch-first, vocab padding sliced off.
    return jnp.transpose(y2d.reshape(T, B, Vp)[:, :, :V], (1, 0, 2))


def _reference_forward(x_in, params, apply_softmax=False):
    """Pure-JAX reference of the same math (PyTorch GRU semantics)."""
    emb, w_ih, w_hh = params["char_emb"], params["w_ih"], params["w_hh"]
    b_ih, b_hh, w_fc, b_fc = params["b_ih"], params["b_hh"], params["w_fc"], params["b_fc"]
    H = w_hh.shape[0]
    x_emb = jnp.take(emb, x_in, axis=0)                          # (B, T, E)
    B, T, _ = x_emb.shape

    def step(h, x_t):
        gx = x_t @ w_ih + b_ih
        gh = h @ w_hh + b_hh
        r = jax.nn.sigmoid(gx[:, :H] + gh[:, :H])
        z = jax.nn.sigmoid(gx[:, H:2 * H] + gh[:, H:2 * H])
        n = jnp.tanh(gx[:, 2 * H:] + r * gh[:, 2 * H:])
        h_new = (1.0 - z) * n + z * h
        return h_new, h_new

    _, hs = jax.lax.scan(step, jnp.zeros((B, H), jnp.float32),
                         jnp.transpose(x_emb, (1, 0, 2)))
    y = jnp.einsum("tbh,hv->tbv", hs, w_fc) + b_fc
    if apply_softmax:
        y = jax.nn.softmax(y, axis=-1)
    return jnp.transpose(y, (1, 0, 2))


def init_params(key, char_vocab_size, char_embedding_size, rnn_hidden_size,
                padding_idx=0):
    V, E, H = char_vocab_size, char_embedding_size, rnn_hidden_size
    ks = jax.random.split(key, 7)
    emb = jax.random.normal(ks[0], (V, E), jnp.float32)
    emb = emb.at[padding_idx].set(0.0)                           # padding_idx row zeroed
    s = 1.0 / jnp.sqrt(jnp.float32(H))
    w_ih = jax.random.uniform(ks[1], (E, 3 * H), jnp.float32, -s, s)
    w_hh = jax.random.uniform(ks[2], (H, 3 * H), jnp.float32, -s, s)
    b_ih = jax.random.uniform(ks[3], (3 * H,), jnp.float32, -s, s)
    b_hh = jax.random.uniform(ks[4], (3 * H,), jnp.float32, -s, s)
    sf = 1.0 / jnp.sqrt(jnp.float32(H))
    w_fc = jax.random.uniform(ks[5], (H, V), jnp.float32, -sf, sf)
    b_fc = jax.random.uniform(ks[6], (V,), jnp.float32, -sf, sf)
    return dict(char_emb=emb, w_ih=w_ih, w_hh=w_hh, b_ih=b_ih, b_hh=b_hh,
                w_fc=w_fc, b_fc=b_fc)


if __name__ == "__main__":
    char_vocab_size = 48
    char_embedding_size = 32
    rnn_hidden_size = 32
    batch, seq = 2, 8

    key = jax.random.PRNGKey(0)
    k_params, k_tokens = jax.random.split(key)
    params = init_params(k_params, char_vocab_size, char_embedding_size,
                         rnn_hidden_size, padding_idx=0)
    x_in = jax.random.randint(k_tokens, (batch, seq), 0, char_vocab_size,
                              dtype=jnp.int32)

    y = jax.block_until_ready(
        gru_annotations_lm_forward(x_in, params, apply_softmax=False))
    y_ref = _reference_forward(x_in, params, apply_softmax=False)
    assert y.shape == (batch, seq, char_vocab_size)
    assert jnp.allclose(y, y_ref, atol=1e-4, rtol=1e-4), "logits mismatch vs JAX reference"

    # softmax branch
    y_sm = jax.block_until_ready(
        gru_annotations_lm_forward(x_in, params, apply_softmax=True))
    y_sm_ref = _reference_forward(x_in, params, apply_softmax=True)
    assert jnp.allclose(jnp.sum(y_sm, axis=-1), 1.0, atol=1e-4)
    assert jnp.allclose(y_sm, y_sm_ref, atol=1e-4, rtol=1e-4), "softmax mismatch vs JAX reference"

    print("KERNEL_OK")
</pallas_src>

<mosaic_0001>
module attributes {stable_mosaic.version = 11 : i64} {
  func.func @gru_lm_kernel(%arg0: memref<16x1xi32, #tpu.memory_space<vmem>>, %arg1: memref<48x32xf32, #tpu.memory_space<vmem>>, %arg2: memref<32x96xf32, #tpu.memory_space<vmem>>, %arg3: memref<32x96xf32, #tpu.memory_space<vmem>>, %arg4: memref<1x96xf32, #tpu.memory_space<vmem>>, %arg5: memref<1x96xf32, #tpu.memory_space<vmem>>, %arg6: memref<32x128xf32, #tpu.memory_space<vmem>>, %arg7: memref<1x128xf32, #tpu.memory_space<vmem>>, %arg8: memref<16x128xf32, #tpu.memory_space<vmem>>, %arg9: memref<16x96xf32, #tpu.memory_space<vmem>>, %arg10: memref<16x32xf32, #tpu.memory_space<vmem>>) attributes {dimension_semantics = [], scalar_prefetch = 0 : i64, scratch_operands = 2 : i64, tpu.core_type = #tpu.core_type<tc>} {
    %c0 = arith.constant 0 : index
    %c0_0 = arith.constant 0 : index
    %0 = vector.load %arg0[%c0, %c0_0] : memref<16x1xi32, #tpu.memory_space<vmem>>, vector<16x1xi32>
    %1 = tpu.iota {dimensions = array<i32: 1>} : vector<16x48xi32>
    %2 = vector.broadcast %0 : vector<16x1xi32> to vector<16x48xi32>
    %3 = arith.cmpi eq, %2, %1 : vector<16x48xi32>
    %4 = arith.extui %3 : vector<16x48xi1> to vector<16x48xi32>
    %5 = arith.sitofp %4 : vector<16x48xi32> to vector<16x48xf32>
    %c0_1 = arith.constant 0 : index
    %c0_2 = arith.constant 0 : index
    %6 = vector.load %arg1[%c0_1, %c0_2] : memref<48x32xf32, #tpu.memory_space<vmem>>, vector<48x32xf32>
    %cst = arith.constant dense<0.000000e+00> : vector<16x32xf32>
    %7 = tpu.matmul %5, %6, %cst {dimension_numbers = #tpu.dot_dimension_numbers<[1], [0], [0], [1], [0, 0, 1, 1], [], []>} : vector<16x48xf32>, vector<48x32xf32>, vector<16x32xf32> -> vector<16x32xf32>
    %c0_3 = arith.constant 0 : index
    %c0_4 = arith.constant 0 : index
    %8 = vector.load %arg2[%c0_3, %c0_4] : memref<32x96xf32, #tpu.memory_space<vmem>>, vector<32x96xf32>
    %cst_5 = arith.constant dense<0.000000e+00> : vector<16x96xf32>
    %9 = tpu.matmul %7, %8, %cst_5 {dimension_numbers = #tpu.dot_dimension_numbers<[1], [0], [0], [1], [0, 0, 1, 1], [], []>} : vector<16x32xf32>, vector<32x96xf32>, vector<16x96xf32> -> vector<16x96xf32>
    %c0_6 = arith.constant 0 : index
    %c0_7 = arith.constant 0 : index
    %10 = vector.load %arg4[%c0_6, %c0_7] : memref<1x96xf32, #tpu.memory_space<vmem>>, vector<1x96xf32>
    %11 = vector.broadcast %10 : vector<1x96xf32> to vector<16x96xf32>
    %12 = arith.addf %9, %11 : vector<16x96xf32>
    %c0_8 = arith.constant 0 : index
    %c0_9 = arith.constant 0 : index
    %13 = vector.load %arg9[%c0_8, %c0_9] : memref<16x96xf32, #tpu.memory_space<vmem>>, vector<16x96xf32>
    tpu.vector_store %arg9[%c0_8, %c0_9], %12 {strides = array<i32>} : memref<16x96xf32, #tpu.memory_space<vmem>>, vector<16x96xf32>,
    %c0_10 = arith.constant 0 : index
    %c0_11 = arith.constant 0 : index
    %14 = vector.load %arg3[%c0_10, %c0_11] : memref<32x96xf32, #tpu.memory_space<vmem>>, vector<32x96xf32>
    %c0_12 = arith.constant 0 : index
    %c0_13 = arith.constant 0 : index
    %15 = vector.load %arg5[%c0_12, %c0_13] : memref<1x96xf32, #tpu.memory_space<vmem>>, vector<1x96xf32>
    %cst_14 = arith.constant 0.000000e+00 : f32
    %16 = vector.broadcast %cst_14 : f32 to vector<2x32xf32>
    %c0_15 = arith.constant 0 : index
    %c0_16 = arith.constant 0 : index
    %17 = vector.load %arg9[%c0_15, %c0_16] : memref<16x96xf32, #tpu.memory_space<vmem>>, vector<2x96xf32>
    %cst_17 = arith.constant dense<0.000000e+00> : vector<2x96xf32>
    %18 = tpu.matmul %16, %14, %cst_17 {dimension_numbers = #tpu.dot_dimension_numbers<[1], [0], [0], [1], [0, 0, 1, 1], [], []>} : vector<2x32xf32>, vector<32x96xf32>, vector<2x96xf32> -> vector<2x96xf32>
    %19 = vector.broadcast %15 : vector<1x96xf32> to vector<2x96xf32>
    %20 = arith.addf %18, %19 : vector<2x96xf32>
    %21 = vector.extract_strided_slice %17 {offsets = [0, 0], sizes = [2, 32], strides = [1, 1]} : vector<2x96xf32> to vector<2x32xf32>
    %22 = vector.extract_strided_slice %20 {offsets = [0, 0], sizes = [2, 32], strides = [1, 1]} : vector<2x96xf32> to vector<2x32xf32>
    %23 = arith.addf %21, %22 : vector<2x32xf32>
    %24 = arith.negf %23 : vector<2x32xf32>
    %25 = math.exp %24 : vector<2x32xf32>
    %cst_18 = arith.constant 1.000000e+00 : f32
    %26 = vector.broadcast %cst_18 : f32 to vector<2x32xf32>
    %27 = arith.addf %26, %25 : vector<2x32xf32>
    %28 = arith.divf %26, %27 : vector<2x32xf32>
    %29 = vector.extract_strided_slice %17 {offsets = [0, 32], sizes = [2, 32], strides = [1, 1]} : vector<2x96xf32> to vector<2x32xf32>
    %30 = vector.extract_strided_slice %20 {offsets = [0, 32], sizes = [2, 32], strides = [1, 1]} : vector<2x96xf32> to vector<2x32xf32>
    %31 = arith.addf %29, %30 : vector<2x32xf32>
    %32 = arith.negf %31 : vector<2x32xf32>
    %33 = math.exp %32 : vector<2x32xf32>
    %cst_19 = arith.constant 1.000000e+00 : f32
    %34 = vector.broadcast %cst_19 : f32 to vector<2x32xf32>
    %35 = arith.addf %34, %33 : vector<2x32xf32>
    %36 = arith.divf %34, %35 : vector<2x32xf32>
    %37 = vector.extract_strided_slice %17 {offsets = [0, 64], sizes = [2, 32], strides = [1, 1]} : vector<2x96xf32> to vector<2x32xf32>
    %38 = vector.extract_strided_slice %20 {offsets = [0, 64], sizes = [2, 32], strides = [1, 1]} : vector<2x96xf32> to vector<2x32xf32>
    %39 = arith.mulf %28, %38 : vector<2x32xf32>
    %40 = arith.addf %37, %39 : vector<2x32xf32>
    %41 = math.tanh %40 : vector<2x32xf32>
    %cst_20 = arith.constant 1.000000e+00 : f32
    %42 = vector.broadcast %cst_20 : f32 to vector<2x32xf32>
    %43 = arith.subf %42, %36 : vector<2x32xf32>
    %44 = arith.mulf %43, %41 : vector<2x32xf32>
    %45 = arith.mulf %36, %16 : vector<2x32xf32>
    %46 = arith.addf %44, %45 : vector<2x32xf32>
    %c0_21 = arith.constant 0 : index
    %c0_22 = arith.constant 0 : index
    %47 = vector.load %arg10[%c0_21, %c0_22] : memref<16x32xf32, #tpu.memory_space<vmem>>, vector<2x32xf32>
    tpu.vector_store %arg10[%c0_21, %c0_22], %46 {strides = array<i32>} : memref<16x32xf32, #tpu.memory_space<vmem>>, vector<2x32xf32>,
    %c2 = arith.constant 2 : index
    %c0_23 = arith.constant 0 : index
    %48 = vector.load %arg9[%c2, %c0_23] : memref<16x96xf32, #tpu.memory_space<vmem>>, vector<2x96xf32>
    %cst_24 = arith.constant dense<0.000000e+00> : vector<2x96xf32>
    %49 = tpu.matmul %46, %14, %cst_24 {dimension_numbers = #tpu.dot_dimension_numbers<[1], [0], [0], [1], [0, 0, 1, 1], [], []>} : vector<2x32xf32>, vector<32x96xf32>, vector<2x96xf32> -> vector<2x96xf32>
    %50 = vector.broadcast %15 : vector<1x96xf32> to vector<2x96xf32>
    %51 = arith.addf %49, %50 : vector<2x96xf32>
    %52 = vector.extract_strided_slice %48 {offsets = [0, 0], sizes = [2, 32], strides = [1, 1]} : vector<2x96xf32> to vector<2x32xf32>
    %53 = vector.extract_strided_slice %51 {offsets = [0, 0], sizes = [2, 32], strides = [1, 1]} : vector<2x96xf32> to vector<2x32xf32>
    %54 = arith.addf %52, %53 : vector<2x32xf32>
    %55 = arith.negf %54 : vector<2x32xf32>
    %56 = math.exp %55 : vector<2x32xf32>
    %cst_25 = arith.constant 1.000000e+00 : f32
    %57 = vector.broadcast %cst_25 : f32 to vector<2x32xf32>
    %58 = arith.addf %57, %56 : vector<2x32xf32>
    %59 = arith.divf %57, %58 : vector<2x32xf32>
    %60 = vector.extract_strided_slice %48 {offsets = [0, 32], sizes = [2, 32], strides = [1, 1]} : vector<2x96xf32> to vector<2x32xf32>
    %61 = vector.extract_strided_slice %51 {offsets = [0, 32], sizes = [2, 32], strides = [1, 1]} : vector<2x96xf32> to vector<2x32xf32>
    %62 = arith.addf %60, %61 : vector<2x32xf32>
    %63 = arith.negf %62 : vector<2x32xf32>
    %64 = math.exp %63 : vector<2x32xf32>
    %cst_26 = arith.constant 1.000000e+00 : f32
    %65 = vector.broadcast %cst_26 : f32 to vector<2x32xf32>
    %66 = arith.addf %65, %64 : vector<2x32xf32>
    %67 = arith.divf %65, %66 : vector<2x32xf32>
    %68 = vector.extract_strided_slice %48 {offsets = [0, 64], sizes = [2, 32], strides = [1, 1]} : vector<2x96xf32> to vector<2x32xf32>
    %69 = vector.extract_strided_slice %51 {offsets = [0, 64], sizes = [2, 32], strides = [1, 1]} : vector<2x96xf32> to vector<2x32xf32>
    %70 = arith.mulf %59, %69 : vector<2x32xf32>
    %71 = arith.addf %68, %70 : vector<2x32xf32>
    %72 = math.tanh %71 : vector<2x32xf32>
    %cst_27 = arith.constant 1.000000e+00 : f32
    %73 = vector.broadcast %cst_27 : f32 to vector<2x32xf32>
    %74 = arith.subf %73, %67 : vector<2x32xf32>
    %75 = arith.mulf %74, %72 : vector<2x32xf32>
    %76 = arith.mulf %67, %46 : vector<2x32xf32>
    %77 = arith.addf %75, %76 : vector<2x32xf32>
    %c2_28 = arith.constant 2 : index
    %c0_29 = arith.constant 0 : index
    %78 = vector.load %arg10[%c2_28, %c0_29] : memref<16x32xf32, #tpu.memory_space<vmem>>, vector<2x32xf32>
    tpu.vector_store %arg10[%c2_28, %c0_29], %77 {strides = array<i32>} : memref<16x32xf32, #tpu.memory_space<vmem>>, vector<2x32xf32>,
    %c4 = arith.constant 4 : index
    %c0_30 = arith.constant 0 : index
    %79 = vector.load %arg9[%c4, %c0_30] : memref<16x96xf32, #tpu.memory_space<vmem>>, vector<2x96xf32>
    %cst_31 = arith.constant dense<0.000000e+00> : vector<2x96xf32>
    %80 = tpu.matmul %77, %14, %cst_31 {dimension_numbers = #tpu.dot_dimension_numbers<[1], [0], [0], [1], [0, 0, 1, 1], [], []>} : vector<2x32xf32>, vector<32x96xf32>, vector<2x96xf32> -> vector<2x96xf32>
    %81 = vector.broadcast %15 : vector<1x96xf32> to vector<2x96xf32>
    %82 = arith.addf %80, %81 : vector<2x96xf32>
    %83 = vector.extract_strided_slice %79 {offsets = [0, 0], sizes = [2, 32], strides = [1, 1]} : vector<2x96xf32> to vector<2x32xf32>
    %84 = vector.extract_strided_slice %82 {offsets = [0, 0], sizes = [2, 32], strides = [1, 1]} : vector<2x96xf32> to vector<2x32xf32>
    %85 = arith.addf %83, %84 : vector<2x32xf32>
    %86 = arith.negf %85 : vector<2x32xf32>
    %87 = math.exp %86 : vector<2x32xf32>
    %cst_32 = arith.constant 1.000000e+00 : f32
    %88 = vector.broadcast %cst_32 : f32 to vector<2x32xf32>
    %89 = arith.addf %88, %87 : vector<2x32xf32>
    %90 = arith.divf %88, %89 : vector<2x32xf32>
    %91 = vector.extract_strided_slice %79 {offsets = [0, 32], sizes = [2, 32], strides = [1, 1]} : vector<2x96xf32> to vector<2x32xf32>
    %92 = vector.extract_strided_slice %82 {offsets = [0, 32], sizes = [2, 32], strides = [1, 1]} : vector<2x96xf32> to vector<2x32xf32>
    %93 = arith.addf %91, %92 : vector<2x32xf32>
    %94 = arith.negf %93 : vector<2x32xf32>
    %95 = math.exp %94 : vector<2x32xf32>
    %cst_33 = arith.constant 1.000000e+00 : f32
    %96 = vector.broadcast %cst_33 : f32 to vector<2x32xf32>
    %97 = arith.addf %96, %95 : vector<2x32xf32>
    %98 = arith.divf %96, %97 : vector<2x32xf32>
    %99 = vector.extract_strided_slice %79 {offsets = [0, 64], sizes = [2, 32], strides = [1, 1]} : vector<2x96xf32> to vector<2x32xf32>
    %100 = vector.extract_strided_slice %82 {offsets = [0, 64], sizes = [2, 32], strides = [1, 1]} : vector<2x96xf32> to vector<2x32xf32>
    %101 = arith.mulf %90, %100 : vector<2x32xf32>
    %102 = arith.addf %99, %101 : vector<2x32xf32>
    %103 = math.tanh %102 : vector<2x32xf32>
    %cst_34 = arith.constant 1.000000e+00 : f32
    %104 = vector.broadcast %cst_34 : f32 to vector<2x32xf32>
    %105 = arith.subf %104, %98 : vector<2x32xf32>
    %106 = arith.mulf %105, %103 : vector<2x32xf32>
    %107 = arith.mulf %98, %77 : vector<2x32xf32>
    %108 = arith.addf %106, %107 : vector<2x32xf32>
    %c4_35 = arith.constant 4 : index
    %c0_36 = arith.constant 0 : index
    %109 = vector.load %arg10[%c4_35, %c0_36] : memref<16x32xf32, #tpu.memory_space<vmem>>, vector<2x32xf32>
    tpu.vector_store %arg10[%c4_35, %c0_36], %108 {strides = array<i32>} : memref<16x32xf32, #tpu.memory_space<vmem>>, vector<2x32xf32>,
    %c6 = arith.constant 6 : index
    %c0_37 = arith.constant 0 : index
    %110 = vector.load %arg9[%c6, %c0_37] : memref<16x96xf32, #tpu.memory_space<vmem>>, vector<2x96xf32>
    %cst_38 = arith.constant dense<0.000000e+00> : vector<2x96xf32>
    %111 = tpu.matmul %108, %14, %cst_38 {dimension_numbers = #tpu.dot_dimension_numbers<[1], [0], [0], [1], [0, 0, 1, 1], [], []>} : vector<2x32xf32>, vector<32x96xf32>, vector<2x96xf32> -> vector<2x96xf32>
    %112 = vector.broadcast %15 : vector<1x96xf32> to vector<2x96xf32>
    %113 = arith.addf %111, %112 : vector<2x96xf32>
    %114 = vector.extract_strided_slice %110 {offsets = [0, 0], sizes = [2, 32], strides = [1, 1]} : vector<2x96xf32> to vector<2x32xf32>
    %115 = vector.extract_strided_slice %113 {offsets = [0, 0], sizes = [2, 32], strides = [1, 1]} : vector<2x96xf32> to vector<2x32xf32>
    %116 = arith.addf %114, %115 : vector<2x32xf32>
    %117 = arith.negf %116 : vector<2x32xf32>
    %118 = math.exp %117 : vector<2x32xf32>
    %cst_39 = arith.constant 1.000000e+00 : f32
    %119 = vector.broadcast %cst_39 : f32 to vector<2x32xf32>
    %120 = arith.addf %119, %118 : vector<2x32xf32>
    %121 = arith.divf %119, %120 : vector<2x32xf32>
    %122 = vector.extract_strided_slice %110 {offsets = [0, 32], sizes = [2, 32], strides = [1, 1]} : vector<2x96xf32> to vector<2x32xf32>
    %123 = vector.extract_strided_slice %113 {offsets = [0, 32], sizes = [2, 32], strides = [1, 1]} : vector<2x96xf32> to vector<2x32xf32>
    %124 = arith.addf %122, %123 : vector<2x32xf32>
    %125 = arith.negf %124 : vector<2x32xf32>
    %126 = math.exp %125 : vector<2x32xf32>
    %cst_40 = arith.constant 1.000000e+00 : f32
    %127 = vector.broadcast %cst_40 : f32 to vector<2x32xf32>
    %128 = arith.addf %127, %126 : vector<2x32xf32>
    %129 = arith.divf %127, %128 : vector<2x32xf32>
    %130 = vector.extract_strided_slice %110 {offsets = [0, 64], sizes = [2, 32], strides = [1, 1]} : vector<2x96xf32> to vector<2x32xf32>
    %131 = vector.extract_strided_slice %113 {offsets = [0, 64], sizes = [2, 32], strides = [1, 1]} : vector<2x96xf32> to vector<2x32xf32>
    %132 = arith.mulf %121, %131 : vector<2x32xf32>
    %133 = arith.addf %130, %132 : vector<2x32xf32>
    %134 = math.tanh %133 : vector<2x32xf32>
    %cst_41 = arith.constant 1.000000e+00 : f32
    %135 = vector.broadcast %cst_41 : f32 to vector<2x32xf32>
    %136 = arith.subf %135, %129 : vector<2x32xf32>
    %137 = arith.mulf %136, %134 : vector<2x32xf32>
    %138 = arith.mulf %129, %108 : vector<2x32xf32>
    %139 = arith.addf %137, %138 : vector<2x32xf32>
    %c6_42 = arith.constant 6 : index
    %c0_43 = arith.constant 0 : index
    %140 = vector.load %arg10[%c6_42, %c0_43] : memref<16x32xf32, #tpu.memory_space<vmem>>, vector<2x32xf32>
    tpu.vector_store %arg10[%c6_42, %c0_43], %139 {strides = array<i32>} : memref<16x32xf32, #tpu.memory_space<vmem>>, vector<2x32xf32>,
    %c8 = arith.constant 8 : index
    %c0_44 = arith.constant 0 : index
    %141 = vector.load %arg9[%c8, %c0_44] : memref<16x96xf32, #tpu.memory_space<vmem>>, vector<2x96xf32>
    %cst_45 = arith.constant dense<0.000000e+00> : vector<2x96xf32>
    %142 = tpu.matmul %139, %14, %cst_45 {dimension_numbers = #tpu.dot_dimension_numbers<[1], [0], [0], [1], [0, 0, 1, 1], [], []>} : vector<2x32xf32>, vector<32x96xf32>, vector<2x96xf32> -> vector<2x96xf32>
    %143 = vector.broadcast %15 : vector<1x96xf32> to vector<2x96xf32>
    %144 = arith.addf %142, %143 : vector<2x96xf32>
    %145 = vector.extract_strided_slice %141 {offsets = [0, 0], sizes = [2, 32], strides = [1, 1]} : vector<2x96xf32> to vector<2x32xf32>
    %146 = vector.extract_strided_slice %144 {offsets = [0, 0], sizes = [2, 32], strides = [1, 1]} : vector<2x96xf32> to vector<2x32xf32>
    %147 = arith.addf %145, %146 : vector<2x32xf32>
    %148 = arith.negf %147 : vector<2x32xf32>
    %149 = math.exp %148 : vector<2x32xf32>
    %cst_46 = arith.constant 1.000000e+00 : f32
    %150 = vector.broadcast %cst_46 : f32 to vector<2x32xf32>
    %151 = arith.addf %150, %149 : vector<2x32xf32>
    %152 = arith.divf %150, %151 : vector<2x32xf32>
    %153 = vector.extract_strided_slice %141 {offsets = [0, 32], sizes = [2, 32], strides = [1, 1]} : vector<2x96xf32> to vector<2x32xf32>
    %154 = vector.extract_strided_slice %144 {offsets = [0, 32], sizes = [2, 32], strides = [1, 1]} : vector<2x96xf32> to vector<2x32xf32>
    %155 = arith.addf %153, %154 : vector<2x32xf32>
    %156 = arith.negf %155 : vector<2x32xf32>
    %157 = math.exp %156 : vector<2x32xf32>
    %cst_47 = arith.constant 1.000000e+00 : f32
    %158 = vector.broadcast %cst_47 : f32 to vector<2x32xf32>
    %159 = arith.addf %158, %157 : vector<2x32xf32>
    %160 = arith.divf %158, %159 : vector<2x32xf32>
    %161 = vector.extract_strided_slice %141 {offsets = [0, 64], sizes = [2, 32], strides = [1, 1]} : vector<2x96xf32> to vector<2x32xf32>
    %162 = vector.extract_strided_slice %144 {offsets = [0, 64], sizes = [2, 32], strides = [1, 1]} : vector<2x96xf32> to vector<2x32xf32>
    %163 = arith.mulf %152, %162 : vector<2x32xf32>
    %164 = arith.addf %161, %163 : vector<2x32xf32>
    %165 = math.tanh %164 : vector<2x32xf32>
    %cst_48 = arith.constant 1.000000e+00 : f32
    %166 = vector.broadcast %cst_48 : f32 to vector<2x32xf32>
    %167 = arith.subf %166, %160 : vector<2x32xf32>
    %168 = arith.mulf %167, %165 : vector<2x32xf32>
    %169 = arith.mulf %160, %139 : vector<2x32xf32>
    %170 = arith.addf %168, %169 : vector<2x32xf32>
    %c8_49 = arith.constant 8 : index
    %c0_50 = arith.constant 0 : index
    %171 = vector.load %arg10[%c8_49, %c0_50] : memref<16x32xf32, #tpu.memory_space<vmem>>, vector<2x32xf32>
    tpu.vector_store %arg10[%c8_49, %c0_50], %170 {strides = array<i32>} : memref<16x32xf32, #tpu.memory_space<vmem>>, vector<2x32xf32>,
    %c10 = arith.constant 10 : index
    %c0_51 = arith.constant 0 : index
    %172 = vector.load %arg9[%c10, %c0_51] : memref<16x96xf32, #tpu.memory_space<vmem>>, vector<2x96xf32>
    %cst_52 = arith.constant dense<0.000000e+00> : vector<2x96xf32>
    %173 = tpu.matmul %170, %14, %cst_52 {dimension_numbers = #tpu.dot_dimension_numbers<[1], [0], [0], [1], [0, 0, 1, 1], [], []>} : vector<2x32xf32>, vector<32x96xf32>, vector<2x96xf32> -> vector<2x96xf32>
    %174 = vector.broadcast %15 : vector<1x96xf32> to vector<2x96xf32>
    %175 = arith.addf %173, %174 : vector<2x96xf32>
    %176 = vector.extract_strided_slice %172 {offsets = [0, 0], sizes = [2, 32], strides = [1, 1]} : vector<2x96xf32> to vector<2x32xf32>
    %177 = vector.extract_strided_slice %175 {offsets = [0, 0], sizes = [2, 32], strides = [1, 1]} : vector<2x96xf32> to vector<2x32xf32>
    %178 = arith.addf %176, %177 : vector<2x32xf32>
    %179 = arith.negf %178 : vector<2x32xf32>
    %180 = math.exp %179 : vector<2x32xf32>
    %cst_53 = arith.constant 1.000000e+00 : f32
    %181 = vector.broadcast %cst_53 : f32 to vector<2x32xf32>
    %182 = arith.addf %181, %180 : vector<2x32xf32>
    %183 = arith.divf %181, %182 : vector<2x32xf32>
    %184 = vector.extract_strided_slice %172 {offsets = [0, 32], sizes = [2, 32], strides = [1, 1]} : vector<2x96xf32> to vector<2x32xf32>
    %185 = vector.extract_strided_slice %175 {offsets = [0, 32], sizes = [2, 32], strides = [1, 1]} : vector<2x96xf32> to vector<2x32xf32>
    %186 = arith.addf %184, %185 : vector<2x32xf32>
    %187 = arith.negf %186 : vector<2x32xf32>
    %188 = math.exp %187 : vector<2x32xf32>
    %cst_54 = arith.constant 1.000000e+00 : f32
    %189 = vector.broadcast %cst_54 : f32 to vector<2x32xf32>
    %190 = arith.addf %189, %188 : vector<2x32xf32>
    %191 = arith.divf %189, %190 : vector<2x32xf32>
    %192 = vector.extract_strided_slice %172 {offsets = [0, 64], sizes = [2, 32], strides = [1, 1]} : vector<2x96xf32> to vector<2x32xf32>
    %193 = vector.extract_strided_slice %175 {offsets = [0, 64], sizes = [2, 32], strides = [1, 1]} : vector<2x96xf32> to vector<2x32xf32>
    %194 = arith.mulf %183, %193 : vector<2x32xf32>
    %195 = arith.addf %192, %194 : vector<2x32xf32>
    %196 = math.tanh %195 : vector<2x32xf32>
    %cst_55 = arith.constant 1.000000e+00 : f32
    %197 = vector.broadcast %cst_55 : f32 to vector<2x32xf32>
    %198 = arith.subf %197, %191 : vector<2x32xf32>
    %199 = arith.mulf %198, %196 : vector<2x32xf32>
    %200 = arith.mulf %191, %170 : vector<2x32xf32>
    %201 = arith.addf %199, %200 : vector<2x32xf32>
    %c10_56 = arith.constant 10 : index
    %c0_57 = arith.constant 0 : index
    %202 = vector.load %arg10[%c10_56, %c0_57] : memref<16x32xf32, #tpu.memory_space<vmem>>, vector<2x32xf32>
    tpu.vector_store %arg10[%c10_56, %c0_57], %201 {strides = array<i32>} : memref<16x32xf32, #tpu.memory_space<vmem>>, vector<2x32xf32>,
    %c12 = arith.constant 12 : index
    %c0_58 = arith.constant 0 : index
    %203 = vector.load %arg9[%c12, %c0_58] : memref<16x96xf32, #tpu.memory_space<vmem>>, vector<2x96xf32>
    %cst_59 = arith.constant dense<0.000000e+00> : vector<2x96xf32>
    %204 = tpu.matmul %201, %14, %cst_59 {dimension_numbers = #tpu.dot_dimension_numbers<[1], [0], [0], [1], [0, 0, 1, 1], [], []>} : vector<2x32xf32>, vector<32x96xf32>, vector<2x96xf32> -> vector<2x96xf32>
    %205 = vector.broadcast %15 : vector<1x96xf32> to vector<2x96xf32>
    %206 = arith.addf %204, %205 : vector<2x96xf32>
    %207 = vector.extract_strided_slice %203 {offsets = [0, 0], sizes = [2, 32], strides = [1, 1]} : vector<2x96xf32> to vector<2x32xf32>
    %208 = vector.extract_strided_slice %206 {offsets = [0, 0], sizes = [2, 32], strides = [1, 1]} : vector<2x96xf32> to vector<2x32xf32>
    %209 = arith.addf %207, %208 : vector<2x32xf32>
    %210 = arith.negf %209 : vector<2x32xf32>
    %211 = math.exp %210 : vector<2x32xf32>
    %cst_60 = arith.constant 1.000000e+00 : f32
    %212 = vector.broadcast %cst_60 : f32 to vector<2x32xf32>
    %213 = arith.addf %212, %211 : vector<2x32xf32>
    %214 = arith.divf %212, %213 : vector<2x32xf32>
    %215 = vector.extract_strided_slice %203 {offsets = [0, 32], sizes = [2, 32], strides = [1, 1]} : vector<2x96xf32> to vector<2x32xf32>
    %216 = vector.extract_strided_slice %206 {offsets = [0, 32], sizes = [2, 32], strides = [1, 1]} : vector<2x96xf32> to vector<2x32xf32>
    %217 = arith.addf %215, %216 : vector<2x32xf32>
    %218 = arith.negf %217 : vector<2x32xf32>
    %219 = math.exp %218 : vector<2x32xf32>
    %cst_61 = arith.constant 1.000000e+00 : f32
    %220 = vector.broadcast %cst_61 : f32 to vector<2x32xf32>
    %221 = arith.addf %220, %219 : vector<2x32xf32>
    %222 = arith.divf %220, %221 : vector<2x32xf32>
    %223 = vector.extract_strided_slice %203 {offsets = [0, 64], sizes = [2, 32], strides = [1, 1]} : vector<2x96xf32> to vector<2x32xf32>
    %224 = vector.extract_strided_slice %206 {offsets = [0, 64], sizes = [2, 32], strides = [1, 1]} : vector<2x96xf32> to vector<2x32xf32>
    %225 = arith.mulf %214, %224 : vector<2x32xf32>
    %226 = arith.addf %223, %225 : vector<2x32xf32>
    %227 = math.tanh %226 : vector<2x32xf32>
    %cst_62 = arith.constant 1.000000e+00 : f32
    %228 = vector.broadcast %cst_62 : f32 to vector<2x32xf32>
    %229 = arith.subf %228, %222 : vector<2x32xf32>
    %230 = arith.mulf %229, %227 : vector<2x32xf32>
    %231 = arith.mulf %222, %201 : vector<2x32xf32>
    %232 = arith.addf %230, %231 : vector<2x32xf32>
    %c12_63 = arith.constant 12 : index
    %c0_64 = arith.constant 0 : index
    %233 = vector.load %arg10[%c12_63, %c0_64] : memref<16x32xf32, #tpu.memory_space<vmem>>, vector<2x32xf32>
    tpu.vector_store %arg10[%c12_63, %c0_64], %232 {strides = array<i32>} : memref<16x32xf32, #tpu.memory_space<vmem>>, vector<2x32xf32>,
    %c14 = arith.constant 14 : index
    %c0_65 = arith.constant 0 : index
    %234 = vector.load %arg9[%c14, %c0_65] : memref<16x96xf32, #tpu.memory_space<vmem>>, vector<2x96xf32>
    %cst_66 = arith.constant dense<0.000000e+00> : vector<2x96xf32>
    %235 = tpu.matmul %232, %14, %cst_66 {dimension_numbers = #tpu.dot_dimension_numbers<[1], [0], [0], [1], [0, 0, 1, 1], [], []>} : vector<2x32xf32>, vector<32x96xf32>, vector<2x96xf32> -> vector<2x96xf32>
    %236 = vector.broadcast %15 : vector<1x96xf32> to vector<2x96xf32>
    %237 = arith.addf %235, %236 : vector<2x96xf32>
    %238 = vector.extract_strided_slice %234 {offsets = [0, 0], sizes = [2, 32], strides = [1, 1]} : vector<2x96xf32> to vector<2x32xf32>
    %239 = vector.extract_strided_slice %237 {offsets = [0, 0], sizes = [2, 32], strides = [1, 1]} : vector<2x96xf32> to vector<2x32xf32>
    %240 = arith.addf %238, %239 : vector<2x32xf32>
    %241 = arith.negf %240 : vector<2x32xf32>
    %242 = math.exp %241 : vector<2x32xf32>
    %cst_67 = arith.constant 1.000000e+00 : f32
    %243 = vector.broadcast %cst_67 : f32 to vector<2x32xf32>
    %244 = arith.addf %243, %242 : vector<2x32xf32>
    %245 = arith.divf %243, %244 : vector<2x32xf32>
    %246 = vector.extract_strided_slice %234 {offsets = [0, 32], sizes = [2, 32], strides = [1, 1]} : vector<2x96xf32> to vector<2x32xf32>
    %247 = vector.extract_strided_slice %237 {offsets = [0, 32], sizes = [2, 32], strides = [1, 1]} : vector<2x96xf32> to vector<2x32xf32>
    %248 = arith.addf %246, %247 : vector<2x32xf32>
    %249 = arith.negf %248 : vector<2x32xf32>
    %250 = math.exp %249 : vector<2x32xf32>
    %cst_68 = arith.constant 1.000000e+00 : f32
    %251 = vector.broadcast %cst_68 : f32 to vector<2x32xf32>
    %252 = arith.addf %251, %250 : vector<2x32xf32>
    %253 = arith.divf %251, %252 : vector<2x32xf32>
    %254 = vector.extract_strided_slice %234 {offsets = [0, 64], sizes = [2, 32], strides = [1, 1]} : vector<2x96xf32> to vector<2x32xf32>
    %255 = vector.extract_strided_slice %237 {offsets = [0, 64], sizes = [2, 32], strides = [1, 1]} : vector<2x96xf32> to vector<2x32xf32>
    %256 = arith.mulf %245, %255 : vector<2x32xf32>
    %257 = arith.addf %254, %256 : vector<2x32xf32>
    %258 = math.tanh %257 : vector<2x32xf32>
    %cst_69 = arith.constant 1.000000e+00 : f32
    %259 = vector.broadcast %cst_69 : f32 to vector<2x32xf32>
    %260 = arith.subf %259, %253 : vector<2x32xf32>
    %261 = arith.mulf %260, %258 : vector<2x32xf32>
    %262 = arith.mulf %253, %232 : vector<2x32xf32>
    %263 = arith.addf %261, %262 : vector<2x32xf32>
    %c14_70 = arith.constant 14 : index
    %c0_71 = arith.constant 0 : index
    %264 = vector.load %arg10[%c14_70, %c0_71] : memref<16x32xf32, #tpu.memory_space<vmem>>, vector<2x32xf32>
    tpu.vector_store %arg10[%c14_70, %c0_71], %263 {strides = array<i32>} : memref<16x32xf32, #tpu.memory_space<vmem>>, vector<2x32xf32>,
    %c0_72 = arith.constant 0 : index
    %c0_73 = arith.constant 0 : index
    %265 = vector.load %arg10[%c0_72, %c0_73] : memref<16x32xf32, #tpu.memory_space<vmem>>, vector<16x32xf32>
    %c0_74 = arith.constant 0 : index
    %c0_75 = arith.constant 0 : index
    %266 = vector.load %arg6[%c0_74, %c0_75] : memref<32x128xf32, #tpu.memory_space<vmem>>, vector<32x128xf32>
    %cst_76 = arith.constant dense<0.000000e+00> : vector<16x128xf32>
    %267 = tpu.matmul %265, %266, %cst_76 {dimension_numbers = #tpu.dot_dimension_numbers<[1], [0], [0], [1], [0, 0, 1, 1], [], []>} : vector<16x32xf32>, vector<32x128xf32>, vector<16x128xf32> -> vector<16x128xf32>
    %c0_77 = arith.constant 0 : index
    %c0_78 = arith.constant 0 : index
    %268 = vector.load %arg7[%c0_77, %c0_78] : memref<1x128xf32, #tpu.memory_space<vmem>>, vector<1x128xf32>
    %269 = vector.broadcast %268 : vector<1x128xf32> to vector<16x128xf32>
    %270 = arith.addf %267, %269 : vector<16x128xf32>
    %c0_79 = arith.constant 0 : index
    %c0_80 = arith.constant 0 : index
    %271 = vector.load %arg8[%c0_79, %c0_80] : memref<16x128xf32, #tpu.memory_space<vmem>>, vector<16x128xf32>
    tpu.vector_store %arg8[%c0_79, %c0_80], %270 {strides = array<i32>} : memref<16x128xf32, #tpu.memory_space<vmem>>, vector<16x128xf32>,
    return
  }
}

</mosaic_0001>

<llo_original>
// kernel: gru_annotations_lm_forward.1
$region0: #{gru_annotations_lm_forward.1}
  #allocation0 [shape = 'u32[]', space=smem, size = 0x4, offset = 0x4, fixed_abs, tag = 'smem constant byte address 0x4 - core index']
  #allocation1 [shape = 'u32[144,128]{1,0:T(1,128)}', space=vmem, size = 0x12000, scoped, tag = 'internal scratch']
  #allocation2 [shape = 'f32[16,96]{1,0:T(8,128)}', space=vmem, size = 0x2000, scoped, tag = 'scratch operand']
  #allocation3 [shape = 'f32[16,32]{1,0:T(8,128)}', space=vmem, size = 0x2000, scoped, tag = 'scratch operand']
  %s0 = inlined_call_operand.vmem [shape: s32[16,1], index: 0, kind: input, shape index: {}]
  %s1 = inlined_call_operand.vmem [shape: f32[48,32], index: 1, kind: input, shape index: {}]
  %s2 = inlined_call_operand.vmem [shape: f32[32,96], index: 2, kind: input, shape index: {}]
  %s3 = inlined_call_operand.vmem [shape: f32[32,96], index: 3, kind: input, shape index: {}]
  %s4 = inlined_call_operand.vmem [shape: f32[1,96], index: 4, kind: input, shape index: {}]
  %s5 = inlined_call_operand.vmem [shape: f32[1,96], index: 5, kind: input, shape index: {}]
  %s6 = inlined_call_operand.vmem [shape: f32[32,128], index: 6, kind: input, shape index: {}]
  %s7 = inlined_call_operand.vmem [shape: f32[1,128], index: 7, kind: input, shape index: {}]
  %s8 = inlined_call_operand.vmem [shape: f32[16,128], index: 8, kind: output, shape index: {}]
  %s9 = sld [smem:[#allocation0]]
  $region42: #{gru_annotations_lm_forward.1} parent=0
    _
  %s11 = ssub.s32 1, %s9
  %s12 = scalar_select 0, %s11, %s9
  // Predicated region
  $region2: #{gru_annotations_lm_forward.1} parent=0 // pred_check
    _
  $region3: #{gru_annotations_lm_forward.1} parent=0 // pred_check_branch
    %14 = sbr.rel (0) target = $region5
  $region4: #{gru_annotations_lm_forward.1} parent=0 // pred_region
    _
  $region5: #{gru_annotations_lm_forward.1} parent=0 // pred_fallthru
    _
  // Predicated region
  $region6: #{gru_annotations_lm_forward.1} parent=0 // pred_check
    _
  $region7: #{gru_annotations_lm_forward.1} parent=0 // pred_check_branch
    %16 = sbr.rel (0) target = $region9
  $region8: #{gru_annotations_lm_forward.1} parent=0 // pred_region
    _
  $region9: #{gru_annotations_lm_forward.1} parent=0 // pred_fallthru
    _
  // Predicated region
  $region10: #{gru_annotations_lm_forward.1} parent=0 // pred_check
    _
  $region11: #{gru_annotations_lm_forward.1} parent=0 // pred_check_branch
    %18 = sbr.rel (0) target = $region13
  $region12: #{gru_annotations_lm_forward.1} parent=0 // pred_region
    _
  $region13: #{gru_annotations_lm_forward.1} parent=0 // pred_fallthru
    _
  // Predicated region
  $region14: #{gru_annotations_lm_forward.1} parent=0 // pred_check
    _
  $region15: #{gru_annotations_lm_forward.1} parent=0 // pred_check_branch
    %20 = sbr.rel (0) target = $region17
  $region16: #{gru_annotations_lm_forward.1} parent=0 // pred_region
    _
  $region17: #{gru_annotations_lm_forward.1} parent=0 // pred_fallthru
    _
  // Predicated region
  $region18: #{gru_annotations_lm_forward.1} parent=0 // pred_check
    _
  $region19: #{gru_annotations_lm_forward.1} parent=0 // pred_check_branch
    %22 = sbr.rel (0) target = $region21
  $region20: #{gru_annotations_lm_forward.1} parent=0 // pred_region
    _
  $region21: #{gru_annotations_lm_forward.1} parent=0 // pred_fallthru
    _
  // Predicated region
  $region22: #{gru_annotations_lm_forward.1} parent=0 // pred_check
    _
  $region23: #{gru_annotations_lm_forward.1} parent=0 // pred_check_branch
    %24 = sbr.rel (0) target = $region25
  $region24: #{gru_annotations_lm_forward.1} parent=0 // pred_region
    _
  $region25: #{gru_annotations_lm_forward.1} parent=0 // pred_fallthru
    _
  // Predicated region
  $region26: #{gru_annotations_lm_forward.1} parent=0 // pred_check
    _
  $region27: #{gru_annotations_lm_forward.1} parent=0 // pred_check_branch
    %26 = sbr.rel (0) target = $region29
  $region28: #{gru_annotations_lm_forward.1} parent=0 // pred_region
    _
  $region29: #{gru_annotations_lm_forward.1} parent=0 // pred_fallthru
    _
  // Predicated region
  $region30: #{gru_annotations_lm_forward.1} parent=0 // pred_check
    _
  $region31: #{gru_annotations_lm_forward.1} parent=0 // pred_check_branch
    %28 = sbr.rel (0) target = $region33
  $region32: #{gru_annotations_lm_forward.1} parent=0 // pred_region
    _
  $region33: #{gru_annotations_lm_forward.1} parent=0 // pred_fallthru
    _
  %v29 = vld [vmem:[%s0] sm:$0xff]
  %v30 = vld [vmem:[%s0 + $0x8] sm:$0xff]
  %v31 = vlaneseq
  %v32 = vand.u32 %v31, 127
  %33 = vset.pattern.permute.xlu0 0
  %34 = vperm.xlu0 %33, %v29
  %v35 = vpop.permute.xlu0 %34
  %36 = vset.pattern.permute.xlu0 0
  %37 = vperm.xlu0 %36, %v30
  %v38 = vpop.permute.xlu0 %37
  %vm39 = vcmp.eq.s32.totalorder %v35, %v32
  %vm40 = vcmp.eq.s32.totalorder %v38, %v32
  %v41 = vsel %vm39, 1, 0
  %v42 = vsel %vm40, 1, 0
  %v43 = vcvt.s32.f32 %v41
  %v44 = vcvt.s32.f32 %v42
  %v45 = vld [vmem:[%s1] sm:$0xff]
  %v46 = vld [vmem:[%s1 + $0x8] sm:$0xff]
  %v47 = vld [vmem:[%s1 + $0x10] sm:$0xff]
  %v48 = vld [vmem:[%s1 + $0x18] sm:$0xff]
  %v49 = vld [vmem:[%s1 + $0x20] sm:$0xff]
  %v50 = vld [vmem:[%s1 + $0x28] sm:$0xff]
  %vm51 = vcmask 392192
  %v53 = vsel %vm51, %v43, 0
  %v56 = vsel %vm51, %v44, 0
  %58 = vmatprep.subr.mxu0 0.0
  %59 = vmatpush1.msra.mxu0 0.0
  %60 = vmatprep.subr.mxu0 0.0
  %61 = vmatpush1.msra.mxu0 0.0
  %62 = vmatprep.subr.mxu0 0.0
  %63 = vmatpush1.msra.mxu0 0.0
  %64 = vmatprep.subr.mxu0 0.0
  %65 = vmatpush1.msra.mxu0 0.0
  %66 = vmatprep.subr.mxu0 0.0
  %67 = vmatpush1.msra.mxu0 0.0
  %68 = vmatprep.subr.mxu0 0.0
  %69 = vmatpush1.msra.mxu0 0.0
  %70 = vmatprep.subr.mxu0 0.0
  %71 = vmatpush1.msra.mxu0 0.0
  %72 = vmatprep.subr.mxu0 0.0
  %73 = vmatpush1.msra.mxu0 0.0
  %74 = vmatprep.subr.mxu0 0.0
  %75 = vmatpush1.msra.mxu0 0.0
  %76 = vmatprep.subr.mxu0 0.0
  %77 = vmatpush1.msra.mxu0 0.0
  %78 = vmatprep.subr.mxu0 0.0
  %79 = vmatpush1.msra.mxu0 %v50
  %80 = vmatprep.subr.mxu0 0.0
  %81 = vmatpush1.msra.mxu0 %v49
  %82 = vmatprep.subr.mxu0 0.0
  %83 = vmatpush1.msra.mxu0 %v48
  %84 = vmatprep.subr.mxu0 0.0
  %85 = vmatpush1.msra.mxu0 %v47
  %86 = vmatprep.subr.mxu0 0.0
  %87 = vmatpush1.msra.mxu0 %v46
  %88 = vmatprep.subr.mxu0 0.0
  %89 = vmatpush1.msra.mxu0 %v45
  %90 = vmatprep.subr.mxu0 0.0
  %91 = vmatpush2.msra.mxu0 0.0
  %92 = vmatprep.subr.mxu0 0.0
  %93 = vmatpush2.msra.mxu0 0.0
  %94 = vmatprep.subr.mxu0 0.0
  %95 = vmatpush2.msra.mxu0 0.0
  %96 = vmatprep.subr.mxu0 0.0
  %97 = vmatpush2.msra.mxu0 0.0
  %98 = vmatprep.subr.mxu0 0.0
  %99 = vmatpush2.msra.mxu0 0.0
  %100 = vmatprep.subr.mxu0 0.0
  %101 = vmatpush2.msra.mxu0 0.0
  %102 = vmatprep.subr.mxu0 0.0
  %103 = vmatpush2.msra.mxu0 0.0
  %104 = vmatprep.subr.mxu0 0.0
  %105 = vmatpush2.msra.mxu0 0.0
  %106 = vmatprep.subr.mxu0 0.0
  %107 = vmatpush2.msra.mxu0 0.0
  %108 = vmatprep.subr.mxu0 0.0
  %109 = vmatpush2.msra.mxu0 0.0
  %110 = vmatprep.subr.mxu0 0.0
  %111 = vmatpush2.msra.mxu0 0.0
  %112 = vmatprep.subr.mxu0 0.0
  %113 = vmatpush2.msra.mxu0 0.0
  %114 = vmatprep.subr.mxu0 0.0
  %115 = vmatpush2.msra.mxu0 0.0
  %116 = vmatprep.subr.mxu0 0.0
  %117 = vmatpush2.msra.mxu0 0.0
  %118 = vmatprep.subr.mxu0 0.0
  %119 = vmatpush2.msra.mxu0 0.0
  %120 = vmatprep.subr.mxu0 0.0
  %121 = vmatpush2.msra.mxu0 0.0
  %122 = vmatprep.mubr.f32.mxu0 0.0
  %123 = vmatmul.mubr.f32.gmra.mxu0 %v53
  %v124 = vpop.f32.mrf.mxu0
  %v125 = vadd.f32 0.0, %v124
  %v126 = vpop.f32.mrf.mxu0
  %127 = vmatprep.mubr.f32.mxu0 0.0
  %128 = vmatmul.mubr.f32.gmra.mxu0 %v56
  %v129 = vpop.f32.mrf.mxu0
  %v130 = vadd.f32 0.0, %v129
  %v131 = vpop.f32.mrf.mxu0
  %132 = vdwg.mxu0
  %v133 = vld [vmem:[%s2] sm:$0xff]
  %v134 = vld [vmem:[%s2 + $0x8] sm:$0xff]
  %v135 = vld [vmem:[%s2 + $0x10] sm:$0xff]
  %v136 = vld [vmem:[%s2 + $0x18] sm:$0xff]
  %v137 = vld [vmem:[%s4] sm:$0x1]
  %v139 = vlaneseq
  %v140 = vshrl.u32 %v139, 7
  %v141 = vsub.s32 0, %v140
  %v142 = vrot.slane %v137, %v141
  %vm144 = vcmask 261120
  %v146 = vsel %vm144, %v125, 0
  %v149 = vsel %vm144, %v130, 0
  %151 = vmatprep.subr.mxu0 0.0
  %152 = vmatpush1.msra.mxu0 0.0
  %153 = vmatprep.subr.mxu0 0.0
  %154 = vmatpush1.msra.mxu0 0.0
  %155 = vmatprep.subr.mxu0 0.0
  %156 = vmatpush1.msra.mxu0 0.0
  %157 = vmatprep.subr.mxu0 0.0
  %158 = vmatpush1.msra.mxu0 0.0
  %159 = vmatprep.subr.mxu0 0.0
  %160 = vmatpush1.msra.mxu0 0.0
  %161 = vmatprep.subr.mxu0 0.0
  %162 = vmatpush1.msra.mxu0 0.0
  %163 = vmatprep.subr.mxu0 0.0
  %164 = vmatpush1.msra.mxu0 0.0
  %165 = vmatprep.subr.mxu0 0.0
  %166 = vmatpush1.msra.mxu0 0.0
  %167 = vmatprep.subr.mxu0 0.0
  %168 = vmatpush1.msra.mxu0 0.0
  %169 = vmatprep.subr.mxu0 0.0
  %170 = vmatpush1.msra.mxu0 0.0
  %171 = vmatprep.subr.mxu0 0.0
  %172 = vmatpush1.msra.mxu0 0.0
  %173 = vmatprep.subr.mxu0 0.0
  %174 = vmatpush1.msra.mxu0 0.0
  %175 = vmatprep.subr.mxu0 0.0
  %176 = vmatpush1.msra.mxu0 %v136
  %177 = vmatprep.subr.mxu0 0.0
  %178 = vmatpush1.msra.mxu0 %v135
  %179 = vmatprep.subr.mxu0 0.0
  %180 = vmatpush1.msra.mxu0 %v134
  %181 = vmatprep.subr.mxu0 0.0
  %182 = vmatpush1.msra.mxu0 %v133
  %183 = vmatprep.subr.mxu0 0.0
  %184 = vmatpush2.msra.mxu0 0.0
  %185 = vmatprep.subr.mxu0 0.0
  %186 = vmatpush2.msra.mxu0 0.0
  %187 = vmatprep.subr.mxu0 0.0
  %188 = vmatpush2.msra.mxu0 0.0
  %189 = vmatprep.subr.mxu0 0.0
  %190 = vmatpush2.msra.mxu0 0.0
  %191 = vmatprep.subr.mxu0 0.0
  %192 = vmatpush2.msra.mxu0 0.0
  %193 = vmatprep.subr.mxu0 0.0
  %194 = vmatpush2.msra.mxu0 0.0
  %195 = vmatprep.subr.mxu0 0.0
  %196 = vmatpush2.msra.mxu0 0.0
  %197 = vmatprep.subr.mxu0 0.0
  %198 = vmatpush2.msra.mxu0 0.0
  %199 = vmatprep.subr.mxu0 0.0
  %200 = vmatpush2.msra.mxu0 0.0
  %201 = vmatprep.subr.mxu0 0.0
  %202 = vmatpush2.msra.mxu0 0.0
  %203 = vmatprep.subr.mxu0 0.0
  %204 = vmatpush2.msra.mxu0 0.0
  %205 = vmatprep.subr.mxu0 0.0
  %206 = vmatpush2.msra.mxu0 0.0
  %207 = vmatprep.subr.mxu0 0.0
  %208 = vmatpush2.msra.mxu0 0.0
  %209 = vmatprep.subr.mxu0 0.0
  %210 = vmatpush2.msra.mxu0 0.0
  %211 = vmatprep.subr.mxu0 0.0
  %212 = vmatpush2.msra.mxu0 0.0
  %213 = vmatprep.subr.mxu0 0.0
  %214 = vmatpush2.msra.mxu0 0.0
  %215 = vmatprep.mubr.f32.mxu0 0.0
  %216 = vmatmul.mubr.f32.gmra.mxu0 %v146
  %v217 = vpop.f32.mrf.mxu0
  %v218 = vadd.f32 %v142, %v217
  %v219 = vpop.f32.mrf.mxu0
  %220 = vmatprep.mubr.f32.mxu0 0.0
  %221 = vmatmul.mubr.f32.gmra.mxu0 %v149
  %v222 = vpop.f32.mrf.mxu0
  %v223 = vadd.f32 %v142, %v222
  %v224 = vpop.f32.mrf.mxu0
  %225 = vdwg.mxu0
  %vm226 = vcmask 785408
  %227 = vst.msk [vmem:[#allocation2] sm:$0xff] %vm226, %v218
  %228 = vst.msk [vmem:[#allocation2 + $0x8] sm:$0xff] %vm226, %v223
  %v229 = vld [vmem:[%s3] sm:$0xff]
  %v230 = vld [vmem:[%s3 + $0x8] sm:$0xff]
  %v231 = vld [vmem:[%s3 + $0x10] sm:$0xff]
  %v232 = vld [vmem:[%s3 + $0x18] sm:$0xff]
  %v233 = vld [vmem:[%s5] sm:$0x1]
  %v234 = vld [vmem:[#allocation2] sm:$0x3]
  %v236 = vlaneseq
  %v237 = vshrl.u32 %v236, 7
  %v238 = vsub.s32 0, %v237
  %v239 = vrot.slane %v233, %v238
  %v242 = vsel %vm144, 0.0, 0
  %244 = vmatprep.subr.mxu0 0.0
  %245 = vmatpush1.msra.mxu0 0.0
  %246 = vmatprep.subr.mxu0 0.0
  %247 = vmatpush1.msra.mxu0 0.0
  %248 = vmatprep.subr.mxu0 0.0
  %249 = vmatpush1.msra.mxu0 0.0
  %250 = vmatprep.subr.mxu0 0.0
  %251 = vmatpush1.msra.mxu0 0.0
  %252 = vmatprep.subr.mxu0 0.0
  %253 = vmatpush1.msra.mxu0 0.0
  %254 = vmatprep.subr.mxu0 0.0
  %255 = vmatpush1.msra.mxu0 0.0
  %256 = vmatprep.subr.mxu0 0.0
  %257 = vmatpush1.msra.mxu0 0.0
  %258 = vmatprep.subr.mxu0 0.0
  %259 = vmatpush1.msra.mxu0 0.0
  %260 = vmatprep.subr.mxu0 0.0
  %261 = vmatpush1.msra.mxu0 0.0
  %262 = vmatprep.subr.mxu0 0.0
  %263 = vmatpush1.msra.mxu0 0.0
  %264 = vmatprep.subr.mxu0 0.0
  %265 = vmatpush1.msra.mxu0 0.0
  %266 = vmatprep.subr.mxu0 0.0
  %267 = vmatpush1.msra.mxu0 0.0
  %268 = vmatprep.subr.mxu0 0.0
  %269 = vmatpush1.msra.mxu0 %v232
  %270 = vmatprep.subr.mxu0 0.0
  %271 = vmatpush1.msra.mxu0 %v231
  %272 = vmatprep.subr.mxu0 0.0
  %273 = vmatpush1.msra.mxu0 %v230
  %274 = vmatprep.subr.mxu0 0.0
  %275 = vmatpush1.msra.mxu0 %v229
  %276 = vmatprep.subr.mxu0 0.0
  %277 = vmatpush2.msra.mxu0 0.0
  %278 = vmatprep.subr.mxu0 0.0
  %279 = vmatpush2.msra.mxu0 0.0
  %280 = vmatprep.subr.mxu0 0.0
  %281 = vmatpush2.msra.mxu0 0.0
  %282 = vmatprep.subr.mxu0 0.0
  %283 = vmatpush2.msra.mxu0 0.0
  %284 = vmatprep.subr.mxu0 0.0
  %285 = vmatpush2.msra.mxu0 0.0
  %286 = vmatprep.subr.mxu0 0.0
  %287 = vmatpush2.msra.mxu0 0.0
  %288 = vmatprep.subr.mxu0 0.0
  %289 = vmatpush2.msra.mxu0 0.0
  %290 = vmatprep.subr.mxu0 0.0
  %291 = vmatpush2.msra.mxu0 0.0
  %292 = vmatprep.subr.mxu0 0.0
  %293 = vmatpush2.msra.mxu0 0.0
  %294 = vmatprep.subr.mxu0 0.0
  %295 = vmatpush2.msra.mxu0 0.0
  %296 = vmatprep.subr.mxu0 0.0
  %297 = vmatpush2.msra.mxu0 0.0
  %298 = vmatprep.subr.mxu0 0.0
  %299 = vmatpush2.msra.mxu0 0.0
  %300 = vmatprep.subr.mxu0 0.0
  %301 = vmatpush2.msra.mxu0 0.0
  %302 = vmatprep.subr.mxu0 0.0
  %303 = vmatpush2.msra.mxu0 0.0
  %304 = vmatprep.subr.mxu0 0.0
  %305 = vmatpush2.msra.mxu0 0.0
  %306 = vmatprep.subr.mxu0 0.0
  %307 = vmatpush2.msra.mxu0 0.0
  %308 = vmatprep.mubr.f32.mxu0 0.0
  %309 = vmatmul.mubr.f32.gmra.mxu0 %v242
  %v310 = vpop.f32.mrf.mxu0
  %v311 = vadd.f32 %v239, %v310
  %v312 = vpop.f32.mrf.mxu0
  %313 = vdwg.mxu0
  %v314 = vadd.f32 %v234, %v311
  %v315 = vxor.u32 %v314, 2147483648
  %v316 = vmul.f32 %v315, 1.442695
  %v317 = vpow.pop %v316
  %v318 = vadd.f32 %v317, 1.0
  %v319 = vrcp.pop %v318
  %v320 = vmul.f32 1.0, %v319
  %322 = vrot.lane.b32.xlu0 %v311, 64
  %v323 = vpop.permute.xlu0 %322
  %v325 = vmul.f32 %v320, %v323
  %327 = vrot.lane.b32.xlu0 %v325, 64
  %v328 = vpop.permute.xlu0 %327
  %v330 = vadd.f32 %v234, %v328
  %v331 = vtanh.pop %v330
  %v332 = vsub.f32 1.0, %v320
  %334 = vrot.lane.b32.xlu0 %v331, 96
  %v335 = vpop.permute.xlu0 %334
  %v337 = vmul.f32 %v332, %v335
  %v338 = vmul.f32 %v320, 0.0
  %v339 = vadd.f32 %v337, %v338
  %341 = vrot.lane.b32.xlu0 %v339, 96
  %v342 = vpop.permute.xlu0 %341
  %vm344 = vcmask 254976
  %345 = vst.msk [vmem:[#allocation3] sm:$0x3] %vm344, %v342
  %v346 = vld [vmem:[#allocation2 + $0x2] sm:$0x3]
  %v347 = vsel %vm144, %v342, 0
  %349 = vmatprep.subr.mxu0 0.0
  %350 = vmatpush1.msra.mxu0 0.0
  %351 = vmatprep.subr.mxu0 0.0
  %352 = vmatpush1.msra.mxu0 0.0
  %353 = vmatprep.subr.mxu0 0.0
  %354 = vmatpush1.msra.mxu0 0.0
  %355 = vmatprep.subr.mxu0 0.0
  %356 = vmatpush1.msra.mxu0 0.0
  %357 = vmatprep.subr.mxu0 0.0
  %358 = vmatpush1.msra.mxu0 0.0
  %359 = vmatprep.subr.mxu0 0.0
  %360 = vmatpush1.msra.mxu0 0.0
  %361 = vmatprep.subr.mxu0 0.0
  %362 = vmatpush1.msra.mxu0 0.0
  %363 = vmatprep.subr.mxu0 0.0
  %364 = vmatpush1.msra.mxu0 0.0
  %365 = vmatprep.subr.mxu0 0.0
  %366 = vmatpush1.msra.mxu0 0.0
  %367 = vmatprep.subr.mxu0 0.0
  %368 = vmatpush1.msra.mxu0 0.0
  %369 = vmatprep.subr.mxu0 0.0
  %370 = vmatpush1.msra.mxu0 0.0
  %371 = vmatprep.subr.mxu0 0.0
  %372 = vmatpush1.msra.mxu0 0.0
  %373 = vmatprep.subr.mxu0 0.0
  %374 = vmatpush1.msra.mxu0 %v232
  %375 = vmatprep.subr.mxu0 0.0
  %376 = vmatpush1.msra.mxu0 %v231
  %377 = vmatprep.subr.mxu0 0.0
  %378 = vmatpush1.msra.mxu0 %v230
  %379 = vmatprep.subr.mxu0 0.0
  %380 = vmatpush1.msra.mxu0 %v229
  %381 = vmatprep.subr.mxu0 0.0
  %382 = vmatpush2.msra.mxu0 0.0
  %383 = vmatprep.subr.mxu0 0.0
  %384 = vmatpush2.msra.mxu0 0.0
  %385 = vmatprep.subr.mxu0 0.0
  %386 = vmatpush2.msra.mxu0 0.0
  %387 = vmatprep.subr.mxu0 0.0
  %388 = vmatpush2.msra.mxu0 0.0
  %389 = vmatprep.subr.mxu0 0.0
  %390 = vmatpush2.msra.mxu0 0.0
  %391 = vmatprep.subr.mxu0 0.0
  %392 = vmatpush2.msra.mxu0 0.0
  %393 = vmatprep.subr.mxu0 0.0
  %394 = vmatpush2.msra.mxu0 0.0
  %395 = vmatprep.subr.mxu0 0.0
  %396 = vmatpush2.msra.mxu0 0.0
  %397 = vmatprep.subr.mxu0 0.0
  %398 = vmatpush2.msra.mxu0 0.0
  %399 = vmatprep.subr.mxu0 0.0
  %400 = vmatpush2.msra.mxu0 0.0
  %401 = vmatprep.subr.mxu0 0.0
  %402 = vmatpush2.msra.mxu0 0.0
  %403 = vmatprep.subr.mxu0 0.0
  %404 = vmatpush2.msra.mxu0 0.0
  %405 = vmatprep.subr.mxu0 0.0
  %406 = vmatpush2.msra.mxu0 0.0
  %407 = vmatprep.subr.mxu0 0.0
  %408 = vmatpush2.msra.mxu0 0.0
  %409 = vmatprep.subr.mxu0 0.0
  %410 = vmatpush2.msra.mxu0 0.0
  %411 = vmatprep.subr.mxu0 0.0
  %412 = vmatpush2.msra.mxu0 0.0
  %413 = vmatprep.mubr.f32.mxu0 0.0
  %414 = vmatmul.mubr.f32.gmra.mxu0 %v347
  %v415 = vpop.f32.mrf.mxu0
  %v416 = vadd.f32 %v239, %v415
  %v417 = vpop.f32.mrf.mxu0
  %418 = vdwg.mxu0
  %v419 = vadd.f32 %v346, %v416
  %v420 = vxor.u32 %v419, 2147483648
  %v421 = vmul.f32 %v420, 1.442695
  %v422 = vpow.pop %v421
  %v423 = vadd.f32 %v422, 1.0
  %v424 = vrcp.pop %v423
  %v425 = vmul.f32 1.0, %v424
  %427 = vrot.lane.b32.xlu0 %v416, 64
  %v428 = vpop.permute.xlu0 %427
  %v430 = vmul.f32 %v425, %v428
  %432 = vrot.lane.b32.xlu0 %v430, 64
  %v433 = vpop.permute.xlu0 %432
  %v435 = vadd.f32 %v346, %v433
  %v436 = vtanh.pop %v435
  %v437 = vsub.f32 1.0, %v425
  %439 = vrot.lane.b32.xlu0 %v436, 96
  %v440 = vpop.permute.xlu0 %439
  %v442 = vmul.f32 %v437, %v440
  %v443 = vmul.f32 %v425, %v339
  %v444 = vadd.f32 %v442, %v443
  %446 = vrot.lane.b32.xlu0 %v444, 96
  %v447 = vpop.permute.xlu0 %446
  %449 = vst.msk [vmem:[#allocation3 + $0x2] sm:$0x3] %vm344, %v447
  %v450 = vld [vmem:[#allocation2 + $0x4] sm:$0x3]
  %v451 = vsel %vm144, %v447, 0
  %453 = vmatprep.subr.mxu0 0.0
  %454 = vmatpush1.msra.mxu0 0.0
  %455 = vmatprep.subr.mxu0 0.0
  %456 = vmatpush1.msra.mxu0 0.0
  %457 = vmatprep.subr.mxu0 0.0
  %458 = vmatpush1.msra.mxu0 0.0
  %459 = vmatprep.subr.mxu0 0.0
  %460 = vmatpush1.msra.mxu0 0.0
  %461 = vmatprep.subr.mxu0 0.0
  %462 = vmatpush1.msra.mxu0 0.0
  %463 = vmatprep.subr.mxu0 0.0
  %464 = vmatpush1.msra.mxu0 0.0
  %465 = vmatprep.subr.mxu0 0.0
  %466 = vmatpush1.msra.mxu0 0.0
  %467 = vmatprep.subr.mxu0 0.0
  %468 = vmatpush1.msra.mxu0 0.0
  %469 = vmatprep.subr.mxu0 0.0
  %470 = vmatpush1.msra.mxu0 0.0
  %471 = vmatprep.subr.mxu0 0.0
  %472 = vmatpush1.msra.mxu0 0.0
  %473 = vmatprep.subr.mxu0 0.0
  %474 = vmatpush1.msra.mxu0 0.0
  %475 = vmatprep.subr.mxu0 0.0
  %476 = vmatpush1.msra.mxu0 0.0
  %477 = vmatprep.subr.mxu0 0.0
  %478 = vmatpush1.msra.mxu0 %v232
  %479 = vmatprep.subr.mxu0 0.0
  %480 = vmatpush1.msra.mxu0 %v231
  %481 = vmatprep.subr.mxu0 0.0
  %482 = vmatpush1.msra.mxu0 %v230
  %483 = vmatprep.subr.mxu0 0.0
  %484 = vmatpush1.msra.mxu0 %v229
  %485 = vmatprep.subr.mxu0 0.0
  %486 = vmatpush2.msra.mxu0 0.0
  %487 = vmatprep.subr.mxu0 0.0
  %488 = vmatpush2.msra.mxu0 0.0
  %489 = vmatprep.subr.mxu0 0.0
  %490 = vmatpush2.msra.mxu0 0.0
  %491 = vmatprep.subr.mxu0 0.0
  %492 = vmatpush2.msra.mxu0 0.0
  %493 = vmatprep.subr.mxu0 0.0
  %494 = vmatpush2.msra.mxu0 0.0
  %495 = vmatprep.subr.mxu0 0.0
  %496 = vmatpush2.msra.mxu0 0.0
  %497 = vmatprep.subr.mxu0 0.0
  %498 = vmatpush2.msra.mxu0 0.0
  %499 = vmatprep.subr.mxu0 0.0
  %500 = vmatpush2.msra.mxu0 0.0
  %501 = vmatprep.subr.mxu0 0.0
  %502 = vmatpush2.msra.mxu0 0.0
  %503 = vmatprep.subr.mxu0 0.0
  %504 = vmatpush2.msra.mxu0 0.0
  %505 = vmatprep.subr.mxu0 0.0
  %506 = vmatpush2.msra.mxu0 0.0
  %507 = vmatprep.subr.mxu0 0.0
  %508 = vmatpush2.msra.mxu0 0.0
  %509 = vmatprep.subr.mxu0 0.0
  %510 = vmatpush2.msra.mxu0 0.0
  %511 = vmatprep.subr.mxu0 0.0
  %512 = vmatpush2.msra.mxu0 0.0
  %513 = vmatprep.subr.mxu0 0.0
  %514 = vmatpush2.msra.mxu0 0.0
  %515 = vmatprep.subr.mxu0 0.0
  %516 = vmatpush2.msra.mxu0 0.0
  %517 = vmatprep.mubr.f32.mxu0 0.0
  %518 = vmatmul.mubr.f32.gmra.mxu0 %v451
  %v519 = vpop.f32.mrf.mxu0
  %v520 = vadd.f32 %v239, %v519
  %v521 = vpop.f32.mrf.mxu0
  %522 = vdwg.mxu0
  %v523 = vadd.f32 %v450, %v520
  %v524 = vxor.u32 %v523, 2147483648
  %v525 = vmul.f32 %v524, 1.442695
  %v526 = vpow.pop %v525
  %v527 = vadd.f32 %v526, 1.0
  %v528 = vrcp.pop %v527
  %v529 = vmul.f32 1.0, %v528
  %531 = vrot.lane.b32.xlu0 %v520, 64
  %v532 = vpop.permute.xlu0 %531
  %v534 = vmul.f32 %v529, %v532
  %536 = vrot.lane.b32.xlu0 %v534, 64
  %v537 = vpop.permute.xlu0 %536
  %v539 = vadd.f32 %v450, %v537
  %v540 = vtanh.pop %v539
  %v541 = vsub.f32 1.0, %v529
  %543 = vrot.lane.b32.xlu0 %v540, 96
  %v544 = vpop.permute.xlu0 %543
  %v546 = vmul.f32 %v541, %v544
  %v547 = vmul.f32 %v529, %v444
  %v548 = vadd.f32 %v546, %v547
  %550 = vrot.lane.b32.xlu0 %v548, 96
  %v551 = vpop.permute.xlu0 %550
  %553 = vst.msk [vmem:[#allocation3 + $0x4] sm:$0x3] %vm344, %v551
  %v554 = vld [vmem:[#allocation2 + $0x6] sm:$0x3]
  %v555 = vsel %vm144, %v551, 0
  %557 = vmatprep.subr.mxu0 0.0
  %558 = vmatpush1.msra.mxu0 0.0
  %559 = vmatprep.subr.mxu0 0.0
  %560 = vmatpush1.msra.mxu0 0.0
  %561 = vmatprep.subr.mxu0 0.0
  %562 = vmatpush1.msra.mxu0 0.0
  %563 = vmatprep.subr.mxu0 0.0
  %564 = vmatpush1.msra.mxu0 0.0
  %565 = vmatprep.subr.mxu0 0.0
  %566 = vmatpush1.msra.mxu0 0.0
  %567 = vmatprep.subr.mxu0 0.0
  %568 = vmatpush1.msra.mxu0 0.0
  %569 = vmatprep.subr.mxu0 0.0
  %570 = vmatpush1.msra.mxu0 0.0
  %571 = vmatprep.subr.mxu0 0.0
  %572 = vmatpush1.msra.mxu0 0.0
  %573 = vmatprep.subr.mxu0 0.0
  %574 = vmatpush1.msra.mxu0 0.0
  %575 = vmatprep.subr.mxu0 0.0
  %576 = vmatpush1.msra.mxu0 0.0
  %577 = vmatprep.subr.mxu0 0.0
  %578 = vmatpush1.msra.mxu0 0.0
  %579 = vmatprep.subr.mxu0 0.0
  %580 = vmatpush1.msra.mxu0 0.0
  %581 = vmatprep.subr.mxu0 0.0
  %582 = vmatpush1.msra.mxu0 %v232
  %583 = vmatprep.subr.mxu0 0.0
  %584 = vmatpush1.msra.mxu0 %v231
  %585 = vmatprep.subr.mxu0 0.0
  %586 = vmatpush1.msra.mxu0 %v230
  %587 = vmatprep.subr.mxu0 0.0
  %588 = vmatpush1.msra.mxu0 %v229
  %589 = vmatprep.subr.mxu0 0.0
  %590 = vmatpush2.msra.mxu0 0.0
  %591 = vmatprep.subr.mxu0 0.0
  %592 = vmatpush2.msra.mxu0 0.0
  %593 = vmatprep.subr.mxu0 0.0
  %594 = vmatpush2.msra.mxu0 0.0
  %595 = vmatprep.subr.mxu0 0.0
  %596 = vmatpush2.msra.mxu0 0.0
  %597 = vmatprep.subr.mxu0 0.0
  %598 = vmatpush2.msra.mxu0 0.0
  %599 = vmatprep.subr.mxu0 0.0
  %600 = vmatpush2.msra.mxu0 0.0
  %601 = vmatprep.subr.mxu0 0.0
  %602 = vmatpush2.msra.mxu0 0.0
  %603 = vmatprep.subr.mxu0 0.0
  %604 = vmatpush2.msra.mxu0 0.0
  %605 = vmatprep.subr.mxu0 0.0
  %606 = vmatpush2.msra.mxu0 0.0
  %607 = vmatprep.subr.mxu0 0.0
  %608 = vmatpush2.msra.mxu0 0.0
  %609 = vmatprep.subr.mxu0 0.0
  %610 = vmatpush2.msra.mxu0 0.0
  %611 = vmatprep.subr.mxu0 0.0
  %612 = vmatpush2.msra.mxu0 0.0
  %613 = vmatprep.subr.mxu0 0.0
  %614 = vmatpush2.msra.mxu0 0.0
  %615 = vmatprep.subr.mxu0 0.0
  %616 = vmatpush2.msra.mxu0 0.0
  %617 = vmatprep.subr.mxu0 0.0
  %618 = vmatpush2.msra.mxu0 0.0
  %619 = vmatprep.subr.mxu0 0.0
  %620 = vmatpush2.msra.mxu0 0.0
  %621 = vmatprep.mubr.f32.mxu0 0.0
  %622 = vmatmul.mubr.f32.gmra.mxu0 %v555
  %v623 = vpop.f32.mrf.mxu0
  %v624 = vadd.f32 %v239, %v623
  %v625 = vpop.f32.mrf.mxu0
  %626 = vdwg.mxu0
  %v627 = vadd.f32 %v554, %v624
  %v628 = vxor.u32 %v627, 2147483648
  %v629 = vmul.f32 %v628, 1.442695
  %v630 = vpow.pop %v629
  %v631 = vadd.f32 %v630, 1.0
  %v632 = vrcp.pop %v631
  %v633 = vmul.f32 1.0, %v632
  %635 = vrot.lane.b32.xlu0 %v624, 64
  %v636 = vpop.permute.xlu0 %635
  %v638 = vmul.f32 %v633, %v636
  %640 = vrot.lane.b32.xlu0 %v638, 64
  %v641 = vpop.permute.xlu0 %640
  %v643 = vadd.f32 %v554, %v641
  %v644 = vtanh.pop %v643
  %v645 = vsub.f32 1.0, %v633
  %647 = vrot.lane.b32.xlu0 %v644, 96
  %v648 = vpop.permute.xlu0 %647
  %v650 = vmul.f32 %v645, %v648
  %v651 = vmul.f32 %v633, %v548
  %v652 = vadd.f32 %v650, %v651
  %654 = vrot.lane.b32.xlu0 %v652, 96
  %v655 = vpop.permute.xlu0 %654
  %657 = vst.msk [vmem:[#allocation3 + $0x6] sm:$0x3] %vm344, %v655
  %v658 = vld [vmem:[#allocation2 + $0x8] sm:$0x3]
  %v659 = vsel %vm144, %v655, 0
  %661 = vmatprep.subr.mxu0 0.0
  %662 = vmatpush1.msra.mxu0 0.0
  %663 = vmatprep.subr.mxu0 0.0
  %664 = vmatpush1.msra.mxu0 0.0
  %665 = vmatprep.subr.mxu0 0.0
  %666 = vmatpush1.msra.mxu0 0.0
  %667 = vmatprep.subr.mxu0 0.0
  %668 = vmatpush1.msra.mxu0 0.0
  %669 = vmatprep.subr.mxu0 0.0
  %670 = vmatpush1.msra.mxu0 0.0
  %671 = vmatprep.subr.mxu0 0.0
  %672 = vmatpush1.msra.mxu0 0.0
  %673 = vmatprep.subr.mxu0 0.0
  %674 = vmatpush1.msra.mxu0 0.0
  %675 = vmatprep.subr.mxu0 0.0
  %676 = vmatpush1.msra.mxu0 0.0
  %677 = vmatprep.subr.mxu0 0.0
  %678 = vmatpush1.msra.mxu0 0.0
  %679 = vmatprep.subr.mxu0 0.0
  %680 = vmatpush1.msra.mxu0 0.0
  %681 = vmatprep.subr.mxu0 0.0
  %682 = vmatpush1.msra.mxu0 0.0
  %683 = vmatprep.subr.mxu0 0.0
  %684 = vmatpush1.msra.mxu0 0.0
  %685 = vmatprep.subr.mxu0 0.0
  %686 = vmatpush1.msra.mxu0 %v232
  %687 = vmatprep.subr.mxu0 0.0
  %688 = vmatpush1.msra.mxu0 %v231
  %689 = vmatprep.subr.mxu0 0.0
  %690 = vmatpush1.msra.mxu0 %v230
  %691 = vmatprep.subr.mxu0 0.0
  %692 = vmatpush1.msra.mxu0 %v229
  %693 = vmatprep.subr.mxu0 0.0
  %694 = vmatpush2.msra.mxu0 0.0
  %695 = vmatprep.subr.mxu0 0.0
  %696 = vmatpush2.msra.mxu0 0.0
  %697 = vmatprep.subr.mxu0 0.0
  %698 = vmatpush2.msra.mxu0 0.0
  %699 = vmatprep.subr.mxu0 0.0
  %700 = vmatpush2.msra.mxu0 0.0
  %701 = vmatprep.subr.mxu0 0.0
  %702 = vmatpush2.msra.mxu0 0.0
  %703 = vmatprep.subr.mxu0 0.0
  %704 = vmatpush2.msra.mxu0 0.0
  %705 = vmatprep.subr.mxu0 0.0
  %706 = vmatpush2.msra.mxu0 0.0
  %707 = vmatprep.subr.mxu0 0.0
  %708 = vmatpush2.msra.mxu0 0.0
  %709 = vmatprep.subr.mxu0 0.0
  %710 = vmatpush2.msra.mxu0 0.0
  %711 = vmatprep.subr.mxu0 0.0
  %712 = vmatpush2.msra.mxu0 0.0
  %713 = vmatprep.subr.mxu0 0.0
  %714 = vmatpush2.msra.mxu0 0.0
  %715 = vmatprep.subr.mxu0 0.0
  %716 = vmatpush2.msra.mxu0 0.0
  %717 = vmatprep.subr.mxu0 0.0
  %718 = vmatpush2.msra.mxu0 0.0
  %719 = vmatprep.subr.mxu0 0.0
  %720 = vmatpush2.msra.mxu0 0.0
  %721 = vmatprep.subr.mxu0 0.0
  %722 = vmatpush2.msra.mxu0 0.0
  %723 = vmatprep.subr.mxu0 0.0
  %724 = vmatpush2.msra.mxu0 0.0
  %725 = vmatprep.mubr.f32.mxu0 0.0
  %726 = vmatmul.mubr.f32.gmra.mxu0 %v659
  %v727 = vpop.f32.mrf.mxu0
  %v728 = vadd.f32 %v239, %v727
  %v729 = vpop.f32.mrf.mxu0
  %730 = vdwg.mxu0
  %v731 = vadd.f32 %v658, %v728
  %v732 = vxor.u32 %v731, 2147483648
  %v733 = vmul.f32 %v732, 1.442695
  %v734 = vpow.pop %v733
  %v735 = vadd.f32 %v734, 1.0
  %v736 = vrcp.pop %v735
  %v737 = vmul.f32 1.0, %v736
  %739 = vrot.lane.b32.xlu0 %v728, 64
  %v740 = vpop.permute.xlu0 %739
  %v742 = vmul.f32 %v737, %v740
  %744 = vrot.lane.b32.xlu0 %v742, 64
  %v745 = vpop.permute.xlu0 %744
  %v747 = vadd.f32 %v658, %v745
  %v748 = vtanh.pop %v747
  %v749 = vsub.f32 1.0, %v737
  %751 = vrot.lane.b32.xlu0 %v748, 96
  %v752 = vpop.permute.xlu0 %751
  %v754 = vmul.f32 %v749, %v752
  %v755 = vmul.f32 %v737, %v652
  %v756 = vadd.f32 %v754, %v755
  %758 = vrot.lane.b32.xlu0 %v756, 96
  %v759 = vpop.permute.xlu0 %758
  %761 = vst.msk [vmem:[#allocation3 + $0x8] sm:$0x3] %vm344, %v759
  %v762 = vld [vmem:[#allocation2 + $0xa] sm:$0x3]
  %v763 = vsel %vm144, %v759, 0
  %765 = vmatprep.subr.mxu0 0.0
  %766 = vmatpush1.msra.mxu0 0.0
  %767 = vmatprep.subr.mxu0 0.0
  %768 = vmatpush1.msra.mxu0 0.0
  %769 = vmatprep.subr.mxu0 0.0
  %770 = vmatpush1.msra.mxu0 0.0
  %771 = vmatprep.subr.mxu0 0.0
  %772 = vmatpush1.msra.mxu0 0.0
  %773 = vmatprep.subr.mxu0 0.0
  %774 = vmatpush1.msra.mxu0 0.0
  %775 = vmatprep.subr.mxu0 0.0
  %776 = vmatpush1.msra.mxu0 0.0
  %777 = vmatprep.subr.mxu0 0.0
  %778 = vmatpush1.msra.mxu0 0.0
  %779 = vmatprep.subr.mxu0 0.0
  %780 = vmatpush1.msra.mxu0 0.0
  %781 = vmatprep.subr.mxu0 0.0
  %782 = vmatpush1.msra.mxu0 0.0
  %783 = vmatprep.subr.mxu0 0.0
  %784 = vmatpush1.msra.mxu0 0.0
  %785 = vmatprep.subr.mxu0 0.0
  %786 = vmatpush1.msra.mxu0 0.0
  %787 = vmatprep.subr.mxu0 0.0
  %788 = vmatpush1.msra.mxu0 0.0
  %789 = vmatprep.subr.mxu0 0.0
  %790 = vmatpush1.msra.mxu0 %v232
  %791 = vmatprep.subr.mxu0 0.0
  %792 = vmatpush1.msra.mxu0 %v231
  %793 = vmatprep.subr.mxu0 0.0
  %794 = vmatpush1.msra.mxu0 %v230
  %795 = vmatprep.subr.mxu0 0.0
  %796 = vmatpush1.msra.mxu0 %v229
  %797 = vmatprep.subr.mxu0 0.0
  %798 = vmatpush2.msra.mxu0 0.0
  %799 = vmatprep.subr.mxu0 0.0
  %800 = vmatpush2.msra.mxu0 0.0
  %801 = vmatprep.subr.mxu0 0.0
  %802 = vmatpush2.msra.mxu0 0.0
  %803 = vmatprep.subr.mxu0 0.0
  %804 = vmatpush2.msra.mxu0 0.0
  %805 = vmatprep.subr.mxu0 0.0
  %806 = vmatpush2.msra.mxu0 0.0
  %807 = vmatprep.subr.mxu0 0.0
  %808 = vmatpush2.msra.mxu0 0.0
  %809 = vmatprep.subr.mxu0 0.0
  %810 = vmatpush2.msra.mxu0 0.0
  %811 = vmatprep.subr.mxu0 0.0
  %812 = vmatpush2.msra.mxu0 0.0
  %813 = vmatprep.subr.mxu0 0.0
  %814 = vmatpush2.msra.mxu0 0.0
  %815 = vmatprep.subr.mxu0 0.0
  %816 = vmatpush2.msra.mxu0 0.0
  %817 = vmatprep.subr.mxu0 0.0
  %818 = vmatpush2.msra.mxu0 0.0
  %819 = vmatprep.subr.mxu0 0.0
  %820 = vmatpush2.msra.mxu0 0.0
  %821 = vmatprep.subr.mxu0 0.0
  %822 = vmatpush2.msra.mxu0 0.0
  %823 = vmatprep.subr.mxu0 0.0
  %824 = vmatpush2.msra.mxu0 0.0
  %825 = vmatprep.subr.mxu0 0.0
  %826 = vmatpush2.msra.mxu0 0.0
  %827 = vmatprep.subr.mxu0 0.0
  %828 = vmatpush2.msra.mxu0 0.0
  %829 = vmatprep.mubr.f32.mxu0 0.0
  %830 = vmatmul.mubr.f32.gmra.mxu0 %v763
  %v831 = vpop.f32.mrf.mxu0
  %v832 = vadd.f32 %v239, %v831
  %v833 = vpop.f32.mrf.mxu0
  %834 = vdwg.mxu0
  %v835 = vadd.f32 %v762, %v832
  %v836 = vxor.u32 %v835, 2147483648
  %v837 = vmul.f32 %v836, 1.442695
  %v838 = vpow.pop %v837
  %v839 = vadd.f32 %v838, 1.0
  %v840 = vrcp.pop %v839
  %v841 = vmul.f32 1.0, %v840
  %843 = vrot.lane.b32.xlu0 %v832, 64
  %v844 = vpop.permute.xlu0 %843
  %v846 = vmul.f32 %v841, %v844
  %848 = vrot.lane.b32.xlu0 %v846, 64
  %v849 = vpop.permute.xlu0 %848
  %v851 = vadd.f32 %v762, %v849
  %v852 = vtanh.pop %v851
  %v853 = vsub.f32 1.0, %v841
  %855 = vrot.lane.b32.xlu0 %v852, 96
  %v856 = vpop.permute.xlu0 %855
  %v858 = vmul.f32 %v853, %v856
  %v859 = vmul.f32 %v841, %v756
  %v860 = vadd.f32 %v858, %v859
  %862 = vrot.lane.b32.xlu0 %v860, 96
  %v863 = vpop.permute.xlu0 %862
  %865 = vst.msk [vmem:[#allocation3 + $0xa] sm:$0x3] %vm344, %v863
  %v866 = vld [vmem:[#allocation2 + $0xc] sm:$0x3]
  %v867 = vsel %vm144, %v863, 0
  %869 = vmatprep.subr.mxu0 0.0
  %870 = vmatpush1.msra.mxu0 0.0
  %871 = vmatprep.subr.mxu0 0.0
  %872 = vmatpush1.msra.mxu0 0.0
  %873 = vmatprep.subr.mxu0 0.0
  %874 = vmatpush1.msra.mxu0 0.0
  %875 = vmatprep.subr.mxu0 0.0
  %876 = vmatpush1.msra.mxu0 0.0
  %877 = vmatprep.subr.mxu0 0.0
  %878 = vmatpush1.msra.mxu0 0.0
  %879 = vmatprep.subr.mxu0 0.0
  %880 = vmatpush1.msra.mxu0 0.0
  %881 = vmatprep.subr.mxu0 0.0
  %882 = vmatpush1.msra.mxu0 0.0
  %883 = vmatprep.subr.mxu0 0.0
  %884 = vmatpush1.msra.mxu0 0.0
  %885 = vmatprep.subr.mxu0 0.0
  %886 = vmatpush1.msra.mxu0 0.0
  %887 = vmatprep.subr.mxu0 0.0
  %888 = vmatpush1.msra.mxu0 0.0
  %889 = vmatprep.subr.mxu0 0.0
  %890 = vmatpush1.msra.mxu0 0.0
  %891 = vmatprep.subr.mxu0 0.0
  %892 = vmatpush1.msra.mxu0 0.0
  %893 = vmatprep.subr.mxu0 0.0
  %894 = vmatpush1.msra.mxu0 %v232
  %895 = vmatprep.subr.mxu0 0.0
  %896 = vmatpush1.msra.mxu0 %v231
  %897 = vmatprep.subr.mxu0 0.0
  %898 = vmatpush1.msra.mxu0 %v230
  %899 = vmatprep.subr.mxu0 0.0
  %900 = vmatpush1.msra.mxu0 %v229
  %901 = vmatprep.subr.mxu0 0.0
  %902 = vmatpush2.msra.mxu0 0.0
  %903 = vmatprep.subr.mxu0 0.0
  %904 = vmatpush2.msra.mxu0 0.0
  %905 = vmatprep.subr.mxu0 0.0
  %906 = vmatpush2.msra.mxu0 0.0
  %907 = vmatprep.subr.mxu0 0.0
  %908 = vmatpush2.msra.mxu0 0.0
  %909 = vmatprep.subr.mxu0 0.0
  %910 = vmatpush2.msra.mxu0 0.0
  %911 = vmatprep.subr.mxu0 0.0
  %912 = vmatpush2.msra.mxu0 0.0
  %913 = vmatprep.subr.mxu0 0.0
  %914 = vmatpush2.msra.mxu0 0.0
  %915 = vmatprep.subr.mxu0 0.0
  %916 = vmatpush2.msra.mxu0 0.0
  %917 = vmatprep.subr.mxu0 0.0
  %918 = vmatpush2.msra.mxu0 0.0
  %919 = vmatprep.subr.mxu0 0.0
  %920 = vmatpush2.msra.mxu0 0.0
  %921 = vmatprep.subr.mxu0 0.0
  %922 = vmatpush2.msra.mxu0 0.0
  %923 = vmatprep.subr.mxu0 0.0
  %924 = vmatpush2.msra.mxu0 0.0
  %925 = vmatprep.subr.mxu0 0.0
  %926 = vmatpush2.msra.mxu0 0.0
  %927 = vmatprep.subr.mxu0 0.0
  %928 = vmatpush2.msra.mxu0 0.0
  %929 = vmatprep.subr.mxu0 0.0
  %930 = vmatpush2.msra.mxu0 0.0
  %931 = vmatprep.subr.mxu0 0.0
  %932 = vmatpush2.msra.mxu0 0.0
  %933 = vmatprep.mubr.f32.mxu0 0.0
  %934 = vmatmul.mubr.f32.gmra.mxu0 %v867
  %v935 = vpop.f32.mrf.mxu0
  %v936 = vadd.f32 %v239, %v935
  %v937 = vpop.f32.mrf.mxu0
  %938 = vdwg.mxu0
  %v939 = vadd.f32 %v866, %v936
  %v940 = vxor.u32 %v939, 2147483648
  %v941 = vmul.f32 %v940, 1.442695
  %v942 = vpow.pop %v941
  %v943 = vadd.f32 %v942, 1.0
  %v944 = vrcp.pop %v943
  %v945 = vmul.f32 1.0, %v944
  %947 = vrot.lane.b32.xlu0 %v936, 64
  %v948 = vpop.permute.xlu0 %947
  %v950 = vmul.f32 %v945, %v948
  %952 = vrot.lane.b32.xlu0 %v950, 64
  %v953 = vpop.permute.xlu0 %952
  %v955 = vadd.f32 %v866, %v953
  %v956 = vtanh.pop %v955
  %v957 = vsub.f32 1.0, %v945
  %959 = vrot.lane.b32.xlu0 %v956, 96
  %v960 = vpop.permute.xlu0 %959
  %v962 = vmul.f32 %v957, %v960
  %v963 = vmul.f32 %v945, %v860
  %v964 = vadd.f32 %v962, %v963
  %966 = vrot.lane.b32.xlu0 %v964, 96
  %v967 = vpop.permute.xlu0 %966
  %969 = vst.msk [vmem:[#allocation3 + $0xc] sm:$0x3] %vm344, %v967
  %v970 = vld [vmem:[#allocation2 + $0xe] sm:$0x3]
  %v971 = vsel %vm144, %v967, 0
  %973 = vmatprep.subr.mxu0 0.0
  %974 = vmatpush1.msra.mxu0 0.0
  %975 = vmatprep.subr.mxu0 0.0
  %976 = vmatpush1.msra.mxu0 0.0
  %977 = vmatprep.subr.mxu0 0.0
  %978 = vmatpush1.msra.mxu0 0.0
  %979 = vmatprep.subr.mxu0 0.0
  %980 = vmatpush1.msra.mxu0 0.0
  %981 = vmatprep.subr.mxu0 0.0
  %982 = vmatpush1.msra.mxu0 0.0
  %983 = vmatprep.subr.mxu0 0.0
  %984 = vmatpush1.msra.mxu0 0.0
  %985 = vmatprep.subr.mxu0 0.0
  %986 = vmatpush1.msra.mxu0 0.0
  %987 = vmatprep.subr.mxu0 0.0
  %988 = vmatpush1.msra.mxu0 0.0
  %989 = vmatprep.subr.mxu0 0.0
  %990 = vmatpush1.msra.mxu0 0.0
  %991 = vmatprep.subr.mxu0 0.0
  %992 = vmatpush1.msra.mxu0 0.0
  %993 = vmatprep.subr.mxu0 0.0
  %994 = vmatpush1.msra.mxu0 0.0
  %995 = vmatprep.subr.mxu0 0.0
  %996 = vmatpush1.msra.mxu0 0.0
  %997 = vmatprep.subr.mxu0 0.0
  %998 = vmatpush1.msra.mxu0 %v232
  %999 = vmatprep.subr.mxu0 0.0
  %1000 = vmatpush1.msra.mxu0 %v231
  %1001 = vmatprep.subr.mxu0 0.0
  %1002 = vmatpush1.msra.mxu0 %v230
  %1003 = vmatprep.subr.mxu0 0.0
  %1004 = vmatpush1.msra.mxu0 %v229
  %1005 = vmatprep.subr.mxu0 0.0
  %1006 = vmatpush2.msra.mxu0 0.0
  %1007 = vmatprep.subr.mxu0 0.0
  %1008 = vmatpush2.msra.mxu0 0.0
  %1009 = vmatprep.subr.mxu0 0.0
  %1010 = vmatpush2.msra.mxu0 0.0
  %1011 = vmatprep.subr.mxu0 0.0
  %1012 = vmatpush2.msra.mxu0 0.0
  %1013 = vmatprep.subr.mxu0 0.0
  %1014 = vmatpush2.msra.mxu0 0.0
  %1015 = vmatprep.subr.mxu0 0.0
  %1016 = vmatpush2.msra.mxu0 0.0
  %1017 = vmatprep.subr.mxu0 0.0
  %1018 = vmatpush2.msra.mxu0 0.0
  %1019 = vmatprep.subr.mxu0 0.0
  %1020 = vmatpush2.msra.mxu0 0.0
  %1021 = vmatprep.subr.mxu0 0.0
  %1022 = vmatpush2.msra.mxu0 0.0
  %1023 = vmatprep.subr.mxu0 0.0
  %1024 = vmatpush2.msra.mxu0 0.0
  %1025 = vmatprep.subr.mxu0 0.0
  %1026 = vmatpush2.msra.mxu0 0.0
  %1027 = vmatprep.subr.mxu0 0.0
  %1028 = vmatpush2.msra.mxu0 0.0
  %1029 = vmatprep.subr.mxu0 0.0
  %1030 = vmatpush2.msra.mxu0 0.0
  %1031 = vmatprep.subr.mxu0 0.0
  %1032 = vmatpush2.msra.mxu0 0.0
  %1033 = vmatprep.subr.mxu0 0.0
  %1034 = vmatpush2.msra.mxu0 0.0
  %1035 = vmatprep.subr.mxu0 0.0
  %1036 = vmatpush2.msra.mxu0 0.0
  %1037 = vmatprep.mubr.f32.mxu0 0.0
  %1038 = vmatmul.mubr.f32.gmra.mxu0 %v971
  %v1039 = vpop.f32.mrf.mxu0
  %v1040 = vadd.f32 %v239, %v1039
  %v1041 = vpop.f32.mrf.mxu0
  %1042 = vdwg.mxu0
  %v1043 = vadd.f32 %v970, %v1040
  %v1044 = vxor.u32 %v1043, 2147483648
  %v1045 = vmul.f32 %v1044, 1.442695
  %v1046 = vpow.pop %v1045
  %v1047 = vadd.f32 %v1046, 1.0
  %v1048 = vrcp.pop %v1047
  %v1049 = vmul.f32 1.0, %v1048
  %1051 = vrot.lane.b32.xlu0 %v1040, 64
  %v1052 = vpop.permute.xlu0 %1051
  %v1054 = vmul.f32 %v1049, %v1052
  %1056 = vrot.lane.b32.xlu0 %v1054, 64
  %v1057 = vpop.permute.xlu0 %1056
  %v1059 = vadd.f32 %v970, %v1057
  %v1060 = vtanh.pop %v1059
  %v1061 = vsub.f32 1.0, %v1049
  %1063 = vrot.lane.b32.xlu0 %v1060, 96
  %v1064 = vpop.permute.xlu0 %1063
  %v1066 = vmul.f32 %v1061, %v1064
  %v1067 = vmul.f32 %v1049, %v964
  %v1068 = vadd.f32 %v1066, %v1067
  %1070 = vrot.lane.b32.xlu0 %v1068, 96
  %v1071 = vpop.permute.xlu0 %1070
  %1073 = vst.msk [vmem:[#allocation3 + $0xe] sm:$0x3] %vm344, %v1071
  %v1074 = vld [vmem:[#allocation3] sm:$0xff]
  %v1075 = vld [vmem:[#allocation3 + $0x8] sm:$0xff]
  %v1076 = vld [vmem:[%s6] sm:$0xff]
  %v1077 = vld [vmem:[%s6 + $0x8] sm:$0xff]
  %v1078 = vld [vmem:[%s6 + $0x10] sm:$0xff]
  %v1079 = vld [vmem:[%s6 + $0x18] sm:$0xff]
  %v1080 = vld [vmem:[%s7] sm:$0x1]
  %v1082 = vlaneseq
  %v1083 = vshrl.u32 %v1082, 7
  %v1084 = vsub.s32 0, %v1083
  %v1085 = vrot.slane %v1080, %v1084
  %v1088 = vsel %vm144, %v1074, 0
  %v1091 = vsel %vm144, %v1075, 0
  %1093 = vmatprep.subr.mxu0 0.0
  %1094 = vmatpush1.msra.mxu0 0.0
  %1095 = vmatprep.subr.mxu0 0.0
  %1096 = vmatpush1.msra.mxu0 0.0
  %1097 = vmatprep.subr.mxu0 0.0
  %1098 = vmatpush1.msra.mxu0 0.0
  %1099 = vmatprep.subr.mxu0 0.0
  %1100 = vmatpush1.msra.mxu0 0.0
  %1101 = vmatprep.subr.mxu0 0.0
  %1102 = vmatpush1.msra.mxu0 0.0
  %1103 = vmatprep.subr.mxu0 0.0
  %1104 = vmatpush1.msra.mxu0 0.0
  %1105 = vmatprep.subr.mxu0 0.0
  %1106 = vmatpush1.msra.mxu0 0.0
  %1107 = vmatprep.subr.mxu0 0.0
  %1108 = vmatpush1.msra.mxu0 0.0
  %1109 = vmatprep.subr.mxu0 0.0
  %1110 = vmatpush1.msra.mxu0 0.0
  %1111 = vmatprep.subr.mxu0 0.0
  %1112 = vmatpush1.msra.mxu0 0.0
  %1113 = vmatprep.subr.mxu0 0.0
  %1114 = vmatpush1.msra.mxu0 0.0
  %1115 = vmatprep.subr.mxu0 0.0
  %1116 = vmatpush1.msra.mxu0 0.0
  %1117 = vmatprep.subr.mxu0 0.0
  %1118 = vmatpush1.msra.mxu0 %v1079
  %1119 = vmatprep.subr.mxu0 0.0
  %1120 = vmatpush1.msra.mxu0 %v1078
  %1121 = vmatprep.subr.mxu0 0.0
  %1122 = vmatpush1.msra.mxu0 %v1077
  %1123 = vmatprep.subr.mxu0 0.0
  %1124 = vmatpush1.msra.mxu0 %v1076
  %1125 = vmatprep.subr.mxu0 0.0
  %1126 = vmatpush2.msra.mxu0 0.0
  %1127 = vmatprep.subr.mxu0 0.0
  %1128 = vmatpush2.msra.mxu0 0.0
  %1129 = vmatprep.subr.mxu0 0.0
  %1130 = vmatpush2.msra.mxu0 0.0
  %1131 = vmatprep.subr.mxu0 0.0
  %1132 = vmatpush2.msra.mxu0 0.0
  %1133 = vmatprep.subr.mxu0 0.0
  %1134 = vmatpush2.msra.mxu0 0.0
  %1135 = vmatprep.subr.mxu0 0.0
  %1136 = vmatpush2.msra.mxu0 0.0
  %1137 = vmatprep.subr.mxu0 0.0
  %1138 = vmatpush2.msra.mxu0 0.0
  %1139 = vmatprep.subr.mxu0 0.0
  %1140 = vmatpush2.msra.mxu0 0.0
  %1141 = vmatprep.subr.mxu0 0.0
  %1142 = vmatpush2.msra.mxu0 0.0
  %1143 = vmatprep.subr.mxu0 0.0
  %1144 = vmatpush2.msra.mxu0 0.0
  %1145 = vmatprep.subr.mxu0 0.0
  %1146 = vmatpush2.msra.mxu0 0.0
  %1147 = vmatprep.subr.mxu0 0.0
  %1148 = vmatpush2.msra.mxu0 0.0
  %1149 = vmatprep.subr.mxu0 0.0
  %1150 = vmatpush2.msra.mxu0 0.0
  %1151 = vmatprep.subr.mxu0 0.0
  %1152 = vmatpush2.msra.mxu0 0.0
  %1153 = vmatprep.subr.mxu0 0.0
  %1154 = vmatpush2.msra.mxu0 0.0
  %1155 = vmatprep.subr.mxu0 0.0
  %1156 = vmatpush2.msra.mxu0 0.0
  %1157 = vmatprep.mubr.f32.mxu0 0.0
  %1158 = vmatmul.mubr.f32.gmra.mxu0 %v1088
  %v1159 = vpop.f32.mrf.mxu0
  %v1160 = vadd.f32 %v1085, %v1159
  %v1161 = vpop.f32.mrf.mxu0
  %1162 = vmatprep.mubr.f32.mxu0 0.0
  %1163 = vmatmul.mubr.f32.gmra.mxu0 %v1091
  %v1164 = vpop.f32.mrf.mxu0
  %v1165 = vadd.f32 %v1085, %v1164
  %v1166 = vpop.f32.mrf.mxu0
  %1167 = vdwg.mxu0
  %1168 = vst [vmem:[%s8] sm:$0xff] %v1160
  %1169 = vst [vmem:[%s8 + $0x8] sm:$0xff] %v1165
  // Predicated region
  $region34: #{gru_annotations_lm_forward.1} parent=0 // pred_check
    _
  $region35: #{gru_annotations_lm_forward.1} parent=0 // pred_check_branch
    %1171 = sbr.rel (0) target = $region37
  $region36: #{gru_annotations_lm_forward.1} parent=0 // pred_region
    _
  $region37: #{gru_annotations_lm_forward.1} parent=0 // pred_fallthru
    _
  // Predicated region
  $region38: #{gru_annotations_lm_forward.1} parent=0 // pred_check
    _
  $region39: #{gru_annotations_lm_forward.1} parent=0 // pred_check_branch
    %1173 = sbr.rel (0) target = $region41
  $region40: #{gru_annotations_lm_forward.1} parent=0 // pred_region
    _
  $region41: #{gru_annotations_lm_forward.1} parent=0 // pred_fallthru
    _

</llo_original>
